<compile_context>
chip_gen: v5e
topology: v5e:2x2
jax: 0.10.0
libtpu: 0.0.40
codegen_flags: <defaults>
</compile_context>

<pallas_src>
import functools
import math

import jax
import jax.numpy as jnp
from jax.experimental import pallas as pl
from jax.experimental.pallas import tpu as pltpu


def _round_up(x, m):
    return (x + m - 1) // m * m


def _nn_kernel(
    x_ref,
    w1_ref, b1_ref,
    w2_ref, b2_ref,
    w3_ref, b3_ref,
    wh_ref, bh_ref,
    out_ref,
    *, num_items, num_utterances,
):
    p_dim = num_items * num_utterances

    x = x_ref[...]                                           # (TB, in) f32

    def dense(a, w_ref, b_ref):
        # bf16 MXU matmul with f32 accumulation; bias added in f32.
        return jnp.dot(a.astype(jnp.bfloat16), w_ref[...],
                       preferred_element_type=jnp.float32) + b_ref[...]

    # Trunk: fc1 -> relu, fc2 + residual -> relu, fc3 + residual -> relu.
    h = jnp.maximum(dense(x, w1_ref, b1_ref), 0.0)
    h = jnp.maximum(dense(h, w2_ref, b2_ref) + h, 0.0)
    h = jnp.maximum(dense(h, w3_ref, b3_ref) + h, 0.0)

    # Single fused head matmul: columns = [v | p1 | p2 | trade | zero-pad].
    fused = dense(h, wh_ref, bh_ref)                         # (TB, F) f32

    # One dense full-width store: places v and the (zero) pad region; the
    # softmax segments below overwrite their columns in VMEM, and the HBM
    # writeback remains a single lane-dense (TB, F) tile.
    out_ref[...] = fused

    def grouped_softmax(col0, n_groups, group_size):
        # Softmax over each contiguous group of `group_size` lanes
        # (== softmax over the last axis of the PyTorch .view(...)).
        # n_groups is small and static -> loop is unrolled at trace time.
        for g in range(n_groups):
            lo = col0 + g * group_size
            seg = fused[:, lo:lo + group_size]
            seg = seg - jnp.max(seg, axis=-1, keepdims=True)
            e = jnp.exp(seg)
            inv = pl.reciprocal(jnp.sum(e, axis=-1, keepdims=True), approx=True)
            out_ref[:, lo:lo + group_size] = e * inv

    # p1 and p2 share the same group structure and are adjacent -> one pass.
    grouped_softmax(1, 2 * num_items, num_utterances)
    # trade: 2*num_items groups of num_items**2.
    grouped_softmax(1 + 2 * p_dim, 2 * num_items, num_items ** 2)


def nn_forward(x, params, *, num_items, num_utterances, tile_b=256,
               interpret=False):
    """x: (..., input_size). Returns (v, (p1, p2, trade)) matching the PyTorch module."""
    batch_shape = x.shape[:-1]
    input_size = x.shape[-1]
    xf = x.reshape(-1, input_size).astype(jnp.float32)
    B = xf.shape[0]

    hidden = params["w1"].shape[1]
    p_dim = num_items * num_utterances
    t_dim = 2 * num_items ** 3
    used = 1 + 2 * p_dim + t_dim
    F = _round_up(used, 256)          # MXU-aligned fused head width (v6e/v7x)

    # Effective batch tile: large (amortizes ~0.35us per-grid-step overhead),
    # but never larger than the padded batch; keep a multiple of 8 sublanes.
    tile_b_eff = min(tile_b, _round_up(max(B, 1), 8))
    tile_b_eff = max(8, _round_up(tile_b_eff, 8))
    B_pad = _round_up(max(B, 1), tile_b_eff)
    if B_pad != B:
        xf = jnp.pad(xf, ((0, B_pad - B), (0, 0)))

    # Fused head weight/bias: [v | p1 | p2 | trade | 0-pad].  Padded columns
    # are zero so they never perturb anything (and never enter a softmax group).
    wh = jnp.zeros((hidden, F), jnp.float32)
    wh = wh.at[:, 0:1].set(params["wv"])
    wh = wh.at[:, 1:1 + p_dim].set(params["wp1"])
    wh = wh.at[:, 1 + p_dim:1 + 2 * p_dim].set(params["wp2"])
    wh = wh.at[:, 1 + 2 * p_dim:used].set(params["wt"])
    bh = jnp.zeros((1, F), jnp.float32)
    bh = bh.at[:, 0:1].set(params["bv"])
    bh = bh.at[:, 1:1 + p_dim].set(params["bp1"])
    bh = bh.at[:, 1 + p_dim:1 + 2 * p_dim].set(params["bp2"])
    bh = bh.at[:, 1 + 2 * p_dim:used].set(params["bt"])

    bf16 = jnp.bfloat16
    weights = [
        params["w1"].astype(bf16), params["b1"].astype(jnp.float32),
        params["w2"].astype(bf16), params["b2"].astype(jnp.float32),
        params["w3"].astype(bf16), params["b3"].astype(jnp.float32),
        wh.astype(bf16), bh.astype(jnp.float32),
    ]

    grid = (B_pad // tile_b_eff,)

    def row_spec(d):
        return pl.BlockSpec((tile_b_eff, d), lambda i: (i, 0))

    def full_spec(shape):
        return pl.BlockSpec(shape, lambda i: (0,) * len(shape))

    in_specs = [row_spec(input_size)] + [full_spec(w.shape) for w in weights]
    out_specs = row_spec(F)
    out_shape = jax.ShapeDtypeStruct((B_pad, F), jnp.float32)

    # Explicit VMEM budget: double-buffered x/out blocks + (double-buffered)
    # weights, with headroom; capped at the 32 MiB scoped default so it is
    # safe on v7x's smaller VMEM as well.
    vmem_bytes = 2 * (tile_b_eff * input_size * 4 + tile_b_eff * F * 4)
    vmem_bytes += 2 * sum(math.prod(w.shape) * w.dtype.itemsize for w in weights)
    vmem_limit = int(min(32 * 2 ** 20, max(4 * 2 ** 20, 4 * vmem_bytes)))

    kernel = functools.partial(
        _nn_kernel, num_items=num_items, num_utterances=num_utterances)

    out = pl.pallas_call(
        kernel,
        out_shape=out_shape,
        grid_spec=pltpu.PrefetchScalarGridSpec(
            num_scalar_prefetch=0,
            grid=grid,
            in_specs=in_specs,
            out_specs=out_specs,
        ),
        compiler_params=pltpu.CompilerParams(
            dimension_semantics=("parallel",),   # batch tiles shard across TCs
            vmem_limit_bytes=vmem_limit),
        interpret=interpret,
    )(xf, *weights)

    out = out[:B]
    v = out[:, 0:1].reshape(*batch_shape, 1)
    p1 = out[:, 1:1 + p_dim].reshape(*batch_shape, num_items, num_utterances)
    p2 = out[:, 1 + p_dim:1 + 2 * p_dim].reshape(
        *batch_shape, num_items, num_utterances)
    tr = out[:, 1 + 2 * p_dim:used].reshape(
        *batch_shape, 2 * num_items, num_items ** 2)
    return v, (p1, p2, tr)


def init_params(key, input_size, hidden_size, num_items, num_utterances):
    """Deterministic synthetic parameters; weights stored as (in, out)."""
    dims = [
        ("w1", (input_size, hidden_size)), ("b1", (1, hidden_size)),
        ("w2", (hidden_size, hidden_size)), ("b2", (1, hidden_size)),
        ("w3", (hidden_size, hidden_size)), ("b3", (1, hidden_size)),
        ("wv", (hidden_size, 1)), ("bv", (1, 1)),
        ("wp1", (hidden_size, num_items * num_utterances)),
        ("bp1", (1, num_items * num_utterances)),
        ("wp2", (hidden_size, num_items * num_utterances)),
        ("bp2", (1, num_items * num_utterances)),
        ("wt", (hidden_size, 2 * num_items ** 3)),
        ("bt", (1, 2 * num_items ** 3)),
    ]
    params = {}
    keys = jax.random.split(key, len(dims))
    for k, (name, shape) in zip(keys, dims):
        fan_in = shape[0] if name.startswith("w") else shape[1]
        bound = 1.0 / jnp.sqrt(jnp.float32(fan_in))
        params[name] = jax.random.uniform(
            k, shape, jnp.float32, minval=-bound, maxval=bound)
    return params


def _reference(x, params, num_items, num_utterances):
    """Pure-JAX f32 reference of the PyTorch forward (for correctness check)."""
    batch_shape = x.shape[:-1]

    def lin(a, w, b):
        return a @ w + b

    h = jax.nn.relu(lin(x, params["w1"], params["b1"]))
    h = jax.nn.relu(lin(h, params["w2"], params["b2"]) + h)
    h = jax.nn.relu(lin(h, params["w3"], params["b3"]) + h)
    v = lin(h, params["wv"], params["bv"])
    p1 = jax.nn.softmax(lin(h, params["wp1"], params["bp1"]).reshape(
        *batch_shape, num_items, num_utterances), axis=-1)
    p2 = jax.nn.softmax(lin(h, params["wp2"], params["bp2"]).reshape(
        *batch_shape, num_items, num_utterances), axis=-1)
    tr = jax.nn.softmax(lin(h, params["wt"], params["bt"]).reshape(
        *batch_shape, 2 * num_items, num_items ** 2), axis=-1)
    return v, (p1, p2, tr)


if __name__ == "__main__":
    input_size, hidden_size = 16, 32
    num_items, num_utterances = 4, 4
    batch_shape = (4, 8)

    key = jax.random.PRNGKey(0)
    pkey, xkey = jax.random.split(key)
    params = init_params(pkey, input_size, hidden_size, num_items, num_utterances)
    x = jax.random.normal(xkey, (*batch_shape, input_size), jnp.float32)

    v, (p1, p2, trade) = nn_forward(
        x, params, num_items=num_items, num_utterances=num_utterances)
    jax.block_until_ready((v, p1, p2, trade))

    assert v.shape == (*batch_shape, 1)
    assert p1.shape == (*batch_shape, num_items, num_utterances)
    assert p2.shape == (*batch_shape, num_items, num_utterances)
    assert trade.shape == (*batch_shape, 2 * num_items, num_items ** 2)

    # Correctness vs. f32 reference (loose tolerance: bf16 MXU inputs +
    # approximate reciprocal in the softmax normalization).
    v_r, (p1_r, p2_r, tr_r) = _reference(x, params, num_items, num_utterances)

    def max_diff(a, b):
        return float(jnp.max(jnp.abs(a - b)))

    assert max_diff(v, v_r) < 1e-1, max_diff(v, v_r)
    assert max_diff(p1, p1_r) < 5e-2, max_diff(p1, p1_r)
    assert max_diff(p2, p2_r) < 5e-2, max_diff(p2, p2_r)
    assert max_diff(trade, tr_r) < 5e-2, max_diff(trade, tr_r)
    assert float(jnp.max(jnp.abs(p1.sum(-1) - 1.0))) < 1e-2
    assert float(jnp.max(jnp.abs(trade.sum(-1) - 1.0))) < 1e-2

    print("KERNEL_OK")
</pallas_src>

<mosaic_0001>
module attributes {stable_mosaic.version = 11 : i64} {
  func.func @_nn_kernel(%arg0: i32, %arg1: memref<32x16xf32, #tpu.memory_space<vmem>>, %arg2: memref<16x32xbf16, #tpu.memory_space<vmem>>, %arg3: memref<1x32xf32, #tpu.memory_space<vmem>>, %arg4: memref<32x32xbf16, #tpu.memory_space<vmem>>, %arg5: memref<1x32xf32, #tpu.memory_space<vmem>>, %arg6: memref<32x32xbf16, #tpu.memory_space<vmem>>, %arg7: memref<1x32xf32, #tpu.memory_space<vmem>>, %arg8: memref<32x256xbf16, #tpu.memory_space<vmem>>, %arg9: memref<1x256xf32, #tpu.memory_space<vmem>>, %arg10: memref<32x256xf32, #tpu.memory_space<vmem>>) attributes {dimension_semantics = [#tpu.dimension_semantics<parallel>], iteration_bounds = array<i64: 1>, scalar_prefetch = 0 : i64, scratch_operands = 0 : i64, tpu.core_type = #tpu.core_type<tc>, window_params = [{transform_indices = @transform_0, window_bounds = array<i64: 32, 16>}, {pipeline_mode = #tpu.pipeline_mode<synchronous>, transform_indices = @transform_1, window_bounds = array<i64: 16, 32>}, {pipeline_mode = #tpu.pipeline_mode<synchronous>, transform_indices = @transform_2, window_bounds = array<i64: 1, 32>}, {pipeline_mode = #tpu.pipeline_mode<synchronous>, transform_indices = @transform_3, window_bounds = array<i64: 32, 32>}, {pipeline_mode = #tpu.pipeline_mode<synchronous>, transform_indices = @transform_4, window_bounds = array<i64: 1, 32>}, {pipeline_mode = #tpu.pipeline_mode<synchronous>, transform_indices = @transform_5, window_bounds = array<i64: 32, 32>}, {pipeline_mode = #tpu.pipeline_mode<synchronous>, transform_indices = @transform_6, window_bounds = array<i64: 1, 32>}, {pipeline_mode = #tpu.pipeline_mode<synchronous>, transform_indices = @transform_7, window_bounds = array<i64: 32, 256>}, {pipeline_mode = #tpu.pipeline_mode<synchronous>, transform_indices = @transform_8, window_bounds = array<i64: 1, 256>}, {transform_indices = @transform_9, window_bounds = array<i64: 32, 256>}]} {
    %c0 = arith.constant 0 : index
    %c0_0 = arith.constant 0 : index
    %0 = vector.load %arg1[%c0, %c0_0] : memref<32x16xf32, #tpu.memory_space<vmem>>, vector<32x16xf32>
    %1 = arith.truncf %0 : vector<32x16xf32> to vector<32x16xbf16>
    %c0_1 = arith.constant 0 : index
    %c0_2 = arith.constant 0 : index
    %2 = vector.load %arg2[%c0_1, %c0_2] : memref<16x32xbf16, #tpu.memory_space<vmem>>, vector<16x32xbf16>
    %cst = arith.constant dense<0.000000e+00> : vector<32x32xf32>
    %3 = tpu.matmul %1, %2, %cst {dimension_numbers = #tpu.dot_dimension_numbers<[1], [0], [0], [1], [0, 0, 1, 1], [], []>} : vector<32x16xbf16>, vector<16x32xbf16>, vector<32x32xf32> -> vector<32x32xf32>
    %c0_3 = arith.constant 0 : index
    %c0_4 = arith.constant 0 : index
    %4 = vector.load %arg3[%c0_3, %c0_4] : memref<1x32xf32, #tpu.memory_space<vmem>>, vector<1x32xf32>
    %5 = vector.broadcast %4 : vector<1x32xf32> to vector<32x32xf32>
    %6 = arith.addf %3, %5 : vector<32x32xf32>
    %cst_5 = arith.constant 0.000000e+00 : f32
    %7 = vector.broadcast %cst_5 : f32 to vector<32x32xf32>
    %8 = arith.maximumf %6, %7 : vector<32x32xf32>
    %9 = arith.truncf %8 : vector<32x32xf32> to vector<32x32xbf16>
    %c0_6 = arith.constant 0 : index
    %c0_7 = arith.constant 0 : index
    %10 = vector.load %arg4[%c0_6, %c0_7] : memref<32x32xbf16, #tpu.memory_space<vmem>>, vector<32x32xbf16>
    %cst_8 = arith.constant dense<0.000000e+00> : vector<32x32xf32>
    %11 = tpu.matmul %9, %10, %cst_8 {dimension_numbers = #tpu.dot_dimension_numbers<[1], [0], [0], [1], [0, 0, 1, 1], [], []>} : vector<32x32xbf16>, vector<32x32xbf16>, vector<32x32xf32> -> vector<32x32xf32>
    %c0_9 = arith.constant 0 : index
    %c0_10 = arith.constant 0 : index
    %12 = vector.load %arg5[%c0_9, %c0_10] : memref<1x32xf32, #tpu.memory_space<vmem>>, vector<1x32xf32>
    %13 = vector.broadcast %12 : vector<1x32xf32> to vector<32x32xf32>
    %14 = arith.addf %11, %13 : vector<32x32xf32>
    %15 = arith.addf %14, %8 : vector<32x32xf32>
    %cst_11 = arith.constant 0.000000e+00 : f32
    %16 = vector.broadcast %cst_11 : f32 to vector<32x32xf32>
    %17 = arith.maximumf %15, %16 : vector<32x32xf32>
    %18 = arith.truncf %17 : vector<32x32xf32> to vector<32x32xbf16>
    %c0_12 = arith.constant 0 : index
    %c0_13 = arith.constant 0 : index
    %19 = vector.load %arg6[%c0_12, %c0_13] : memref<32x32xbf16, #tpu.memory_space<vmem>>, vector<32x32xbf16>
    %cst_14 = arith.constant dense<0.000000e+00> : vector<32x32xf32>
    %20 = tpu.matmul %18, %19, %cst_14 {dimension_numbers = #tpu.dot_dimension_numbers<[1], [0], [0], [1], [0, 0, 1, 1], [], []>} : vector<32x32xbf16>, vector<32x32xbf16>, vector<32x32xf32> -> vector<32x32xf32>
    %c0_15 = arith.constant 0 : index
    %c0_16 = arith.constant 0 : index
    %21 = vector.load %arg7[%c0_15, %c0_16] : memref<1x32xf32, #tpu.memory_space<vmem>>, vector<1x32xf32>
    %22 = vector.broadcast %21 : vector<1x32xf32> to vector<32x32xf32>
    %23 = arith.addf %20, %22 : vector<32x32xf32>
    %24 = arith.addf %23, %17 : vector<32x32xf32>
    %cst_17 = arith.constant 0.000000e+00 : f32
    %25 = vector.broadcast %cst_17 : f32 to vector<32x32xf32>
    %26 = arith.maximumf %24, %25 : vector<32x32xf32>
    %27 = arith.truncf %26 : vector<32x32xf32> to vector<32x32xbf16>
    %c0_18 = arith.constant 0 : index
    %c0_19 = arith.constant 0 : index
    %28 = vector.load %arg8[%c0_18, %c0_19] : memref<32x256xbf16, #tpu.memory_space<vmem>>, vector<32x256xbf16>
    %cst_20 = arith.constant dense<0.000000e+00> : vector<32x256xf32>
    %29 = tpu.matmul %27, %28, %cst_20 {dimension_numbers = #tpu.dot_dimension_numbers<[1], [0], [0], [1], [0, 0, 1, 1], [], []>} : vector<32x32xbf16>, vector<32x256xbf16>, vector<32x256xf32> -> vector<32x256xf32>
    %c0_21 = arith.constant 0 : index
    %c0_22 = arith.constant 0 : index
    %30 = vector.load %arg9[%c0_21, %c0_22] : memref<1x256xf32, #tpu.memory_space<vmem>>, vector<1x256xf32>
    %31 = vector.broadcast %30 : vector<1x256xf32> to vector<32x256xf32>
    %32 = arith.addf %29, %31 : vector<32x256xf32>
    %c0_23 = arith.constant 0 : index
    %c0_24 = arith.constant 0 : index
    %33 = vector.load %arg10[%c0_23, %c0_24] : memref<32x256xf32, #tpu.memory_space<vmem>>, vector<32x256xf32>
    tpu.vector_store %arg10[%c0_23, %c0_24], %32 {strides = array<i32>} : memref<32x256xf32, #tpu.memory_space<vmem>>, vector<32x256xf32>,
    %34 = vector.extract_strided_slice %32 {offsets = [0, 1], sizes = [32, 4], strides = [1, 1]} : vector<32x256xf32> to vector<32x4xf32>
    %cst_25 = arith.constant dense<0xFF800000> : vector<32xf32>
    %35 = vector.multi_reduction <maximumf>, %34, %cst_25 [1] : vector<32x4xf32> to vector<32xf32>
    %36 = vector.shape_cast %35 : vector<32xf32> to vector<32x1xf32>
    %37 = vector.broadcast %36 : vector<32x1xf32> to vector<32x4xf32>
    %38 = arith.subf %34, %37 : vector<32x4xf32>
    %39 = math.exp %38 : vector<32x4xf32>
    %cst_26 = arith.constant dense<0.000000e+00> : vector<32xf32>
    %40 = vector.multi_reduction <add>, %39, %cst_26 [1] : vector<32x4xf32> to vector<32xf32>
    %41 = vector.shape_cast %40 : vector<32xf32> to vector<32x1xf32>
    %42 = tpu.reciprocal %41 {approx = true} : vector<32x1xf32> -> vector<32x1xf32>
    %43 = vector.broadcast %42 : vector<32x1xf32> to vector<32x4xf32>
    %44 = arith.mulf %39, %43 : vector<32x4xf32>
    %c0_27 = arith.constant 0 : index
    %c1 = arith.constant 1 : index
    %45 = vector.load %arg10[%c0_27, %c1] : memref<32x256xf32, #tpu.memory_space<vmem>>, vector<32x4xf32>
    tpu.vector_store %arg10[%c0_27, %c1], %44 {strides = array<i32>} : memref<32x256xf32, #tpu.memory_space<vmem>>, vector<32x4xf32>,
    %46 = vector.extract_strided_slice %32 {offsets = [0, 5], sizes = [32, 4], strides = [1, 1]} : vector<32x256xf32> to vector<32x4xf32>
    %cst_28 = arith.constant dense<0xFF800000> : vector<32xf32>
    %47 = vector.multi_reduction <maximumf>, %46, %cst_28 [1] : vector<32x4xf32> to vector<32xf32>
    %48 = vector.shape_cast %47 : vector<32xf32> to vector<32x1xf32>
    %49 = vector.broadcast %48 : vector<32x1xf32> to vector<32x4xf32>
    %50 = arith.subf %46, %49 : vector<32x4xf32>
    %51 = math.exp %50 : vector<32x4xf32>
    %cst_29 = arith.constant dense<0.000000e+00> : vector<32xf32>
    %52 = vector.multi_reduction <add>, %51, %cst_29 [1] : vector<32x4xf32> to vector<32xf32>
    %53 = vector.shape_cast %52 : vector<32xf32> to vector<32x1xf32>
    %54 = tpu.reciprocal %53 {approx = true} : vector<32x1xf32> -> vector<32x1xf32>
    %55 = vector.broadcast %54 : vector<32x1xf32> to vector<32x4xf32>
    %56 = arith.mulf %51, %55 : vector<32x4xf32>
    %c0_30 = arith.constant 0 : index
    %c5 = arith.constant 5 : index
    %57 = vector.load %arg10[%c0_30, %c5] : memref<32x256xf32, #tpu.memory_space<vmem>>, vector<32x4xf32>
    tpu.vector_store %arg10[%c0_30, %c5], %56 {strides = array<i32>} : memref<32x256xf32, #tpu.memory_space<vmem>>, vector<32x4xf32>,
    %58 = vector.extract_strided_slice %32 {offsets = [0, 9], sizes = [32, 4], strides = [1, 1]} : vector<32x256xf32> to vector<32x4xf32>
    %cst_31 = arith.constant dense<0xFF800000> : vector<32xf32>
    %59 = vector.multi_reduction <maximumf>, %58, %cst_31 [1] : vector<32x4xf32> to vector<32xf32>
    %60 = vector.shape_cast %59 : vector<32xf32> to vector<32x1xf32>
    %61 = vector.broadcast %60 : vector<32x1xf32> to vector<32x4xf32>
    %62 = arith.subf %58, %61 : vector<32x4xf32>
    %63 = math.exp %62 : vector<32x4xf32>
    %cst_32 = arith.constant dense<0.000000e+00> : vector<32xf32>
    %64 = vector.multi_reduction <add>, %63, %cst_32 [1] : vector<32x4xf32> to vector<32xf32>
    %65 = vector.shape_cast %64 : vector<32xf32> to vector<32x1xf32>
    %66 = tpu.reciprocal %65 {approx = true} : vector<32x1xf32> -> vector<32x1xf32>
    %67 = vector.broadcast %66 : vector<32x1xf32> to vector<32x4xf32>
    %68 = arith.mulf %63, %67 : vector<32x4xf32>
    %c0_33 = arith.constant 0 : index
    %c9 = arith.constant 9 : index
    %69 = vector.load %arg10[%c0_33, %c9] : memref<32x256xf32, #tpu.memory_space<vmem>>, vector<32x4xf32>
    tpu.vector_store %arg10[%c0_33, %c9], %68 {strides = array<i32>} : memref<32x256xf32, #tpu.memory_space<vmem>>, vector<32x4xf32>,
    %70 = vector.extract_strided_slice %32 {offsets = [0, 13], sizes = [32, 4], strides = [1, 1]} : vector<32x256xf32> to vector<32x4xf32>
    %cst_34 = arith.constant dense<0xFF800000> : vector<32xf32>
    %71 = vector.multi_reduction <maximumf>, %70, %cst_34 [1] : vector<32x4xf32> to vector<32xf32>
    %72 = vector.shape_cast %71 : vector<32xf32> to vector<32x1xf32>
    %73 = vector.broadcast %72 : vector<32x1xf32> to vector<32x4xf32>
    %74 = arith.subf %70, %73 : vector<32x4xf32>
    %75 = math.exp %74 : vector<32x4xf32>
    %cst_35 = arith.constant dense<0.000000e+00> : vector<32xf32>
    %76 = vector.multi_reduction <add>, %75, %cst_35 [1] : vector<32x4xf32> to vector<32xf32>
    %77 = vector.shape_cast %76 : vector<32xf32> to vector<32x1xf32>
    %78 = tpu.reciprocal %77 {approx = true} : vector<32x1xf32> -> vector<32x1xf32>
    %79 = vector.broadcast %78 : vector<32x1xf32> to vector<32x4xf32>
    %80 = arith.mulf %75, %79 : vector<32x4xf32>
    %c0_36 = arith.constant 0 : index
    %c13 = arith.constant 13 : index
    %81 = vector.load %arg10[%c0_36, %c13] : memref<32x256xf32, #tpu.memory_space<vmem>>, vector<32x4xf32>
    tpu.vector_store %arg10[%c0_36, %c13], %80 {strides = array<i32>} : memref<32x256xf32, #tpu.memory_space<vmem>>, vector<32x4xf32>,
    %82 = vector.extract_strided_slice %32 {offsets = [0, 17], sizes = [32, 4], strides = [1, 1]} : vector<32x256xf32> to vector<32x4xf32>
    %cst_37 = arith.constant dense<0xFF800000> : vector<32xf32>
    %83 = vector.multi_reduction <maximumf>, %82, %cst_37 [1] : vector<32x4xf32> to vector<32xf32>
    %84 = vector.shape_cast %83 : vector<32xf32> to vector<32x1xf32>
    %85 = vector.broadcast %84 : vector<32x1xf32> to vector<32x4xf32>
    %86 = arith.subf %82, %85 : vector<32x4xf32>
    %87 = math.exp %86 : vector<32x4xf32>
    %cst_38 = arith.constant dense<0.000000e+00> : vector<32xf32>
    %88 = vector.multi_reduction <add>, %87, %cst_38 [1] : vector<32x4xf32> to vector<32xf32>
    %89 = vector.shape_cast %88 : vector<32xf32> to vector<32x1xf32>
    %90 = tpu.reciprocal %89 {approx = true} : vector<32x1xf32> -> vector<32x1xf32>
    %91 = vector.broadcast %90 : vector<32x1xf32> to vector<32x4xf32>
    %92 = arith.mulf %87, %91 : vector<32x4xf32>
    %c0_39 = arith.constant 0 : index
    %c17 = arith.constant 17 : index
    %93 = vector.load %arg10[%c0_39, %c17] : memref<32x256xf32, #tpu.memory_space<vmem>>, vector<32x4xf32>
    tpu.vector_store %arg10[%c0_39, %c17], %92 {strides = array<i32>} : memref<32x256xf32, #tpu.memory_space<vmem>>, vector<32x4xf32>,
    %94 = vector.extract_strided_slice %32 {offsets = [0, 21], sizes = [32, 4], strides = [1, 1]} : vector<32x256xf32> to vector<32x4xf32>
    %cst_40 = arith.constant dense<0xFF800000> : vector<32xf32>
    %95 = vector.multi_reduction <maximumf>, %94, %cst_40 [1] : vector<32x4xf32> to vector<32xf32>
    %96 = vector.shape_cast %95 : vector<32xf32> to vector<32x1xf32>
    %97 = vector.broadcast %96 : vector<32x1xf32> to vector<32x4xf32>
    %98 = arith.subf %94, %97 : vector<32x4xf32>
    %99 = math.exp %98 : vector<32x4xf32>
    %cst_41 = arith.constant dense<0.000000e+00> : vector<32xf32>
    %100 = vector.multi_reduction <add>, %99, %cst_41 [1] : vector<32x4xf32> to vector<32xf32>
    %101 = vector.shape_cast %100 : vector<32xf32> to vector<32x1xf32>
    %102 = tpu.reciprocal %101 {approx = true} : vector<32x1xf32> -> vector<32x1xf32>
    %103 = vector.broadcast %102 : vector<32x1xf32> to vector<32x4xf32>
    %104 = arith.mulf %99, %103 : vector<32x4xf32>
    %c0_42 = arith.constant 0 : index
    %c21 = arith.constant 21 : index
    %105 = vector.load %arg10[%c0_42, %c21] : memref<32x256xf32, #tpu.memory_space<vmem>>, vector<32x4xf32>
    tpu.vector_store %arg10[%c0_42, %c21], %104 {strides = array<i32>} : memref<32x256xf32, #tpu.memory_space<vmem>>, vector<32x4xf32>,
    %106 = vector.extract_strided_slice %32 {offsets = [0, 25], sizes = [32, 4], strides = [1, 1]} : vector<32x256xf32> to vector<32x4xf32>
    %cst_43 = arith.constant dense<0xFF800000> : vector<32xf32>
    %107 = vector.multi_reduction <maximumf>, %106, %cst_43 [1] : vector<32x4xf32> to vector<32xf32>
    %108 = vector.shape_cast %107 : vector<32xf32> to vector<32x1xf32>
    %109 = vector.broadcast %108 : vector<32x1xf32> to vector<32x4xf32>
    %110 = arith.subf %106, %109 : vector<32x4xf32>
    %111 = math.exp %110 : vector<32x4xf32>
    %cst_44 = arith.constant dense<0.000000e+00> : vector<32xf32>
    %112 = vector.multi_reduction <add>, %111, %cst_44 [1] : vector<32x4xf32> to vector<32xf32>
    %113 = vector.shape_cast %112 : vector<32xf32> to vector<32x1xf32>
    %114 = tpu.reciprocal %113 {approx = true} : vector<32x1xf32> -> vector<32x1xf32>
    %115 = vector.broadcast %114 : vector<32x1xf32> to vector<32x4xf32>
    %116 = arith.mulf %111, %115 : vector<32x4xf32>
    %c0_45 = arith.constant 0 : index
    %c25 = arith.constant 25 : index
    %117 = vector.load %arg10[%c0_45, %c25] : memref<32x256xf32, #tpu.memory_space<vmem>>, vector<32x4xf32>
    tpu.vector_store %arg10[%c0_45, %c25], %116 {strides = array<i32>} : memref<32x256xf32, #tpu.memory_space<vmem>>, vector<32x4xf32>,
    %118 = vector.extract_strided_slice %32 {offsets = [0, 29], sizes = [32, 4], strides = [1, 1]} : vector<32x256xf32> to vector<32x4xf32>
    %cst_46 = arith.constant dense<0xFF800000> : vector<32xf32>
    %119 = vector.multi_reduction <maximumf>, %118, %cst_46 [1] : vector<32x4xf32> to vector<32xf32>
    %120 = vector.shape_cast %119 : vector<32xf32> to vector<32x1xf32>
    %121 = vector.broadcast %120 : vector<32x1xf32> to vector<32x4xf32>
    %122 = arith.subf %118, %121 : vector<32x4xf32>
    %123 = math.exp %122 : vector<32x4xf32>
    %cst_47 = arith.constant dense<0.000000e+00> : vector<32xf32>
    %124 = vector.multi_reduction <add>, %123, %cst_47 [1] : vector<32x4xf32> to vector<32xf32>
    %125 = vector.shape_cast %124 : vector<32xf32> to vector<32x1xf32>
    %126 = tpu.reciprocal %125 {approx = true} : vector<32x1xf32> -> vector<32x1xf32>
    %127 = vector.broadcast %126 : vector<32x1xf32> to vector<32x4xf32>
    %128 = arith.mulf %123, %127 : vector<32x4xf32>
    %c0_48 = arith.constant 0 : index
    %c29 = arith.constant 29 : index
    %129 = vector.load %arg10[%c0_48, %c29] : memref<32x256xf32, #tpu.memory_space<vmem>>, vector<32x4xf32>
    tpu.vector_store %arg10[%c0_48, %c29], %128 {strides = array<i32>} : memref<32x256xf32, #tpu.memory_space<vmem>>, vector<32x4xf32>,
    %130 = vector.extract_strided_slice %32 {offsets = [0, 33], sizes = [32, 16], strides = [1, 1]} : vector<32x256xf32> to vector<32x16xf32>
    %cst_49 = arith.constant dense<0xFF800000> : vector<32xf32>
    %131 = vector.multi_reduction <maximumf>, %130, %cst_49 [1] : vector<32x16xf32> to vector<32xf32>
    %132 = vector.shape_cast %131 : vector<32xf32> to vector<32x1xf32>
    %133 = vector.broadcast %132 : vector<32x1xf32> to vector<32x16xf32>
    %134 = arith.subf %130, %133 : vector<32x16xf32>
    %135 = math.exp %134 : vector<32x16xf32>
    %cst_50 = arith.constant dense<0.000000e+00> : vector<32xf32>
    %136 = vector.multi_reduction <add>, %135, %cst_50 [1] : vector<32x16xf32> to vector<32xf32>
    %137 = vector.shape_cast %136 : vector<32xf32> to vector<32x1xf32>
    %138 = tpu.reciprocal %137 {approx = true} : vector<32x1xf32> -> vector<32x1xf32>
    %139 = vector.broadcast %138 : vector<32x1xf32> to vector<32x16xf32>
    %140 = arith.mulf %135, %139 : vector<32x16xf32>
    %c0_51 = arith.constant 0 : index
    %c33 = arith.constant 33 : index
    %141 = vector.load %arg10[%c0_51, %c33] : memref<32x256xf32, #tpu.memory_space<vmem>>, vector<32x16xf32>
    tpu.vector_store %arg10[%c0_51, %c33], %140 {strides = array<i32>} : memref<32x256xf32, #tpu.memory_space<vmem>>, vector<32x16xf32>,
    %142 = vector.extract_strided_slice %32 {offsets = [0, 49], sizes = [32, 16], strides = [1, 1]} : vector<32x256xf32> to vector<32x16xf32>
    %cst_52 = arith.constant dense<0xFF800000> : vector<32xf32>
    %143 = vector.multi_reduction <maximumf>, %142, %cst_52 [1] : vector<32x16xf32> to vector<32xf32>
    %144 = vector.shape_cast %143 : vector<32xf32> to vector<32x1xf32>
    %145 = vector.broadcast %144 : vector<32x1xf32> to vector<32x16xf32>
    %146 = arith.subf %142, %145 : vector<32x16xf32>
    %147 = math.exp %146 : vector<32x16xf32>
    %cst_53 = arith.constant dense<0.000000e+00> : vector<32xf32>
    %148 = vector.multi_reduction <add>, %147, %cst_53 [1] : vector<32x16xf32> to vector<32xf32>
    %149 = vector.shape_cast %148 : vector<32xf32> to vector<32x1xf32>
    %150 = tpu.reciprocal %149 {approx = true} : vector<32x1xf32> -> vector<32x1xf32>
    %151 = vector.broadcast %150 : vector<32x1xf32> to vector<32x16xf32>
    %152 = arith.mulf %147, %151 : vector<32x16xf32>
    %c0_54 = arith.constant 0 : index
    %c49 = arith.constant 49 : index
    %153 = vector.load %arg10[%c0_54, %c49] : memref<32x256xf32, #tpu.memory_space<vmem>>, vector<32x16xf32>
    tpu.vector_store %arg10[%c0_54, %c49], %152 {strides = array<i32>} : memref<32x256xf32, #tpu.memory_space<vmem>>, vector<32x16xf32>,
    %154 = vector.extract_strided_slice %32 {offsets = [0, 65], sizes = [32, 16], strides = [1, 1]} : vector<32x256xf32> to vector<32x16xf32>
    %cst_55 = arith.constant dense<0xFF800000> : vector<32xf32>
    %155 = vector.multi_reduction <maximumf>, %154, %cst_55 [1] : vector<32x16xf32> to vector<32xf32>
    %156 = vector.shape_cast %155 : vector<32xf32> to vector<32x1xf32>
    %157 = vector.broadcast %156 : vector<32x1xf32> to vector<32x16xf32>
    %158 = arith.subf %154, %157 : vector<32x16xf32>
    %159 = math.exp %158 : vector<32x16xf32>
    %cst_56 = arith.constant dense<0.000000e+00> : vector<32xf32>
    %160 = vector.multi_reduction <add>, %159, %cst_56 [1] : vector<32x16xf32> to vector<32xf32>
    %161 = vector.shape_cast %160 : vector<32xf32> to vector<32x1xf32>
    %162 = tpu.reciprocal %161 {approx = true} : vector<32x1xf32> -> vector<32x1xf32>
    %163 = vector.broadcast %162 : vector<32x1xf32> to vector<32x16xf32>
    %164 = arith.mulf %159, %163 : vector<32x16xf32>
    %c0_57 = arith.constant 0 : index
    %c65 = arith.constant 65 : index
    %165 = vector.load %arg10[%c0_57, %c65] : memref<32x256xf32, #tpu.memory_space<vmem>>, vector<32x16xf32>
    tpu.vector_store %arg10[%c0_57, %c65], %164 {strides = array<i32>} : memref<32x256xf32, #tpu.memory_space<vmem>>, vector<32x16xf32>,
    %166 = vector.extract_strided_slice %32 {offsets = [0, 81], sizes = [32, 16], strides = [1, 1]} : vector<32x256xf32> to vector<32x16xf32>
    %cst_58 = arith.constant dense<0xFF800000> : vector<32xf32>
    %167 = vector.multi_reduction <maximumf>, %166, %cst_58 [1] : vector<32x16xf32> to vector<32xf32>
    %168 = vector.shape_cast %167 : vector<32xf32> to vector<32x1xf32>
    %169 = vector.broadcast %168 : vector<32x1xf32> to vector<32x16xf32>
    %170 = arith.subf %166, %169 : vector<32x16xf32>
    %171 = math.exp %170 : vector<32x16xf32>
    %cst_59 = arith.constant dense<0.000000e+00> : vector<32xf32>
    %172 = vector.multi_reduction <add>, %171, %cst_59 [1] : vector<32x16xf32> to vector<32xf32>
    %173 = vector.shape_cast %172 : vector<32xf32> to vector<32x1xf32>
    %174 = tpu.reciprocal %173 {approx = true} : vector<32x1xf32> -> vector<32x1xf32>
    %175 = vector.broadcast %174 : vector<32x1xf32> to vector<32x16xf32>
    %176 = arith.mulf %171, %175 : vector<32x16xf32>
    %c0_60 = arith.constant 0 : index
    %c81 = arith.constant 81 : index
    %177 = vector.load %arg10[%c0_60, %c81] : memref<32x256xf32, #tpu.memory_space<vmem>>, vector<32x16xf32>
    tpu.vector_store %arg10[%c0_60, %c81], %176 {strides = array<i32>} : memref<32x256xf32, #tpu.memory_space<vmem>>, vector<32x16xf32>,
    %178 = vector.extract_strided_slice %32 {offsets = [0, 97], sizes = [32, 16], strides = [1, 1]} : vector<32x256xf32> to vector<32x16xf32>
    %cst_61 = arith.constant dense<0xFF800000> : vector<32xf32>
    %179 = vector.multi_reduction <maximumf>, %178, %cst_61 [1] : vector<32x16xf32> to vector<32xf32>
    %180 = vector.shape_cast %179 : vector<32xf32> to vector<32x1xf32>
    %181 = vector.broadcast %180 : vector<32x1xf32> to vector<32x16xf32>
    %182 = arith.subf %178, %181 : vector<32x16xf32>
    %183 = math.exp %182 : vector<32x16xf32>
    %cst_62 = arith.constant dense<0.000000e+00> : vector<32xf32>
    %184 = vector.multi_reduction <add>, %183, %cst_62 [1] : vector<32x16xf32> to vector<32xf32>
    %185 = vector.shape_cast %184 : vector<32xf32> to vector<32x1xf32>
    %186 = tpu.reciprocal %185 {approx = true} : vector<32x1xf32> -> vector<32x1xf32>
    %187 = vector.broadcast %186 : vector<32x1xf32> to vector<32x16xf32>
    %188 = arith.mulf %183, %187 : vector<32x16xf32>
    %c0_63 = arith.constant 0 : index
    %c97 = arith.constant 97 : index
    %189 = vector.load %arg10[%c0_63, %c97] : memref<32x256xf32, #tpu.memory_space<vmem>>, vector<32x16xf32>
    tpu.vector_store %arg10[%c0_63, %c97], %188 {strides = array<i32>} : memref<32x256xf32, #tpu.memory_space<vmem>>, vector<32x16xf32>,
    %190 = vector.extract_strided_slice %32 {offsets = [0, 113], sizes = [32, 16], strides = [1, 1]} : vector<32x256xf32> to vector<32x16xf32>
    %cst_64 = arith.constant dense<0xFF800000> : vector<32xf32>
    %191 = vector.multi_reduction <maximumf>, %190, %cst_64 [1] : vector<32x16xf32> to vector<32xf32>
    %192 = vector.shape_cast %191 : vector<32xf32> to vector<32x1xf32>
    %193 = vector.broadcast %192 : vector<32x1xf32> to vector<32x16xf32>
    %194 = arith.subf %190, %193 : vector<32x16xf32>
    %195 = math.exp %194 : vector<32x16xf32>
    %cst_65 = arith.constant dense<0.000000e+00> : vector<32xf32>
    %196 = vector.multi_reduction <add>, %195, %cst_65 [1] : vector<32x16xf32> to vector<32xf32>
    %197 = vector.shape_cast %196 : vector<32xf32> to vector<32x1xf32>
    %198 = tpu.reciprocal %197 {approx = true} : vector<32x1xf32> -> vector<32x1xf32>
    %199 = vector.broadcast %198 : vector<32x1xf32> to vector<32x16xf32>
    %200 = arith.mulf %195, %199 : vector<32x16xf32>
    %c0_66 = arith.constant 0 : index
    %c113 = arith.constant 113 : index
    %201 = vector.load %arg10[%c0_66, %c113] : memref<32x256xf32, #tpu.memory_space<vmem>>, vector<32x16xf32>
    tpu.vector_store %arg10[%c0_66, %c113], %200 {strides = array<i32>} : memref<32x256xf32, #tpu.memory_space<vmem>>, vector<32x16xf32>,
    %202 = vector.extract_strided_slice %32 {offsets = [0, 129], sizes = [32, 16], strides = [1, 1]} : vector<32x256xf32> to vector<32x16xf32>
    %cst_67 = arith.constant dense<0xFF800000> : vector<32xf32>
    %203 = vector.multi_reduction <maximumf>, %202, %cst_67 [1] : vector<32x16xf32> to vector<32xf32>
    %204 = vector.shape_cast %203 : vector<32xf32> to vector<32x1xf32>
    %205 = vector.broadcast %204 : vector<32x1xf32> to vector<32x16xf32>
    %206 = arith.subf %202, %205 : vector<32x16xf32>
    %207 = math.exp %206 : vector<32x16xf32>
    %cst_68 = arith.constant dense<0.000000e+00> : vector<32xf32>
    %208 = vector.multi_reduction <add>, %207, %cst_68 [1] : vector<32x16xf32> to vector<32xf32>
    %209 = vector.shape_cast %208 : vector<32xf32> to vector<32x1xf32>
    %210 = tpu.reciprocal %209 {approx = true} : vector<32x1xf32> -> vector<32x1xf32>
    %211 = vector.broadcast %210 : vector<32x1xf32> to vector<32x16xf32>
    %212 = arith.mulf %207, %211 : vector<32x16xf32>
    %c0_69 = arith.constant 0 : index
    %c129 = arith.constant 129 : index
    %213 = vector.load %arg10[%c0_69, %c129] : memref<32x256xf32, #tpu.memory_space<vmem>>, vector<32x16xf32>
    tpu.vector_store %arg10[%c0_69, %c129], %212 {strides = array<i32>} : memref<32x256xf32, #tpu.memory_space<vmem>>, vector<32x16xf32>,
    %214 = vector.extract_strided_slice %32 {offsets = [0, 145], sizes = [32, 16], strides = [1, 1]} : vector<32x256xf32> to vector<32x16xf32>
    %cst_70 = arith.constant dense<0xFF800000> : vector<32xf32>
    %215 = vector.multi_reduction <maximumf>, %214, %cst_70 [1] : vector<32x16xf32> to vector<32xf32>
    %216 = vector.shape_cast %215 : vector<32xf32> to vector<32x1xf32>
    %217 = vector.broadcast %216 : vector<32x1xf32> to vector<32x16xf32>
    %218 = arith.subf %214, %217 : vector<32x16xf32>
    %219 = math.exp %218 : vector<32x16xf32>
    %cst_71 = arith.constant dense<0.000000e+00> : vector<32xf32>
    %220 = vector.multi_reduction <add>, %219, %cst_71 [1] : vector<32x16xf32> to vector<32xf32>
    %221 = vector.shape_cast %220 : vector<32xf32> to vector<32x1xf32>
    %222 = tpu.reciprocal %221 {approx = true} : vector<32x1xf32> -> vector<32x1xf32>
    %223 = vector.broadcast %222 : vector<32x1xf32> to vector<32x16xf32>
    %224 = arith.mulf %219, %223 : vector<32x16xf32>
    %c0_72 = arith.constant 0 : index
    %c145 = arith.constant 145 : index
    %225 = vector.load %arg10[%c0_72, %c145] : memref<32x256xf32, #tpu.memory_space<vmem>>, vector<32x16xf32>
    tpu.vector_store %arg10[%c0_72, %c145], %224 {strides = array<i32>} : memref<32x256xf32, #tpu.memory_space<vmem>>, vector<32x16xf32>,
    return
  }
  func.func @transform_0(%arg0: i32) -> (i32, i32) {
    %c0_i32 = arith.constant 0 : i32
    %c0_i32_0 = arith.constant 0 : i32
    return %arg0, %c0_i32 : i32, i32
  }
  func.func @transform_1(%arg0: i32) -> (i32, i32) {
    %c0_i32 = arith.constant 0 : i32
    %c0_i32_0 = arith.constant 0 : i32
    %c0_i32_1 = arith.constant 0 : i32
    return %c0_i32, %c0_i32_0 : i32, i32
  }
  func.func @transform_2(%arg0: i32) -> (i32, i32) {
    %c0_i32 = arith.constant 0 : i32
    %c0_i32_0 = arith.constant 0 : i32
    %c0_i32_1 = arith.constant 0 : i32
    return %c0_i32, %c0_i32_0 : i32, i32
  }
  func.func @transform_3(%arg0: i32) -> (i32, i32) {
    %c0_i32 = arith.constant 0 : i32
    %c0_i32_0 = arith.constant 0 : i32
    %c0_i32_1 = arith.constant 0 : i32
    return %c0_i32, %c0_i32_0 : i32, i32
  }
  func.func @transform_4(%arg0: i32) -> (i32, i32) {
    %c0_i32 = arith.constant 0 : i32
    %c0_i32_0 = arith.constant 0 : i32
    %c0_i32_1 = arith.constant 0 : i32
    return %c0_i32, %c0_i32_0 : i32, i32
  }
  func.func @transform_5(%arg0: i32) -> (i32, i32) {
    %c0_i32 = arith.constant 0 : i32
    %c0_i32_0 = arith.constant 0 : i32
    %c0_i32_1 = arith.constant 0 : i32
    return %c0_i32, %c0_i32_0 : i32, i32
  }
  func.func @transform_6(%arg0: i32) -> (i32, i32) {
    %c0_i32 = arith.constant 0 : i32
    %c0_i32_0 = arith.constant 0 : i32
    %c0_i32_1 = arith.constant 0 : i32
    return %c0_i32, %c0_i32_0 : i32, i32
  }
  func.func @transform_7(%arg0: i32) -> (i32, i32) {
    %c0_i32 = arith.constant 0 : i32
    %c0_i32_0 = arith.constant 0 : i32
    %c0_i32_1 = arith.constant 0 : i32
    return %c0_i32, %c0_i32_0 : i32, i32
  }
  func.func @transform_8(%arg0: i32) -> (i32, i32) {
    %c0_i32 = arith.constant 0 : i32
    %c0_i32_0 = arith.constant 0 : i32
    %c0_i32_1 = arith.constant 0 : i32
    return %c0_i32, %c0_i32_0 : i32, i32
  }
  func.func @transform_9(%arg0: i32) -> (i32, i32) {
    %c0_i32 = arith.constant 0 : i32
    %c0_i32_0 = arith.constant 0 : i32
    return %arg0, %c0_i32 : i32, i32
  }
}

</mosaic_0001>

<llo_original>
// kernel: tpu_custom_call.1
$region0: #{tpu_custom_call.1}
  #allocation0 [shape = 'u32[]', space=smem, size = 0x4, offset = 0x4, fixed_abs, tag = 'smem constant byte address 0x4 - core index']
  #allocation1 [shape = 'u32[72,128]{1,0:T(1,128)}', space=vmem, size = 0x9000, scoped, tag = 'internal scratch']
  %s0 = inlined_call_operand.vmem [shape: f32[32,16], index: 0, kind: input, shape index: {}]
  %s1 = inlined_call_operand.hbm [shape: bf16[16,32], index: 1, kind: input, shape index: {}]
  %s2 = inlined_call_operand.vmem [shape: f32[1,32], index: 2, kind: input, shape index: {}]
  %s3 = inlined_call_operand.vmem [shape: bf16[32,32], index: 3, kind: input, shape index: {}]
  %s4 = inlined_call_operand.vmem [shape: f32[1,32], index: 4, kind: input, shape index: {}]
  %s5 = inlined_call_operand.hbm [shape: bf16[32,32], index: 5, kind: input, shape index: {}]
  %s6 = inlined_call_operand.vmem [shape: f32[1,32], index: 6, kind: input, shape index: {}]
  %s7 = inlined_call_operand.vmem [shape: bf16[32,256], index: 7, kind: input, shape index: {}]
  %s8 = inlined_call_operand.vmem [shape: f32[1,256], index: 8, kind: input, shape index: {}]
  %s9 = inlined_call_operand.hbm [shape: f32[32,256], index: 9, kind: output, shape index: {}]
  %s10 = sld [smem:[#allocation0]]
  $region54: #{tpu_custom_call.1} parent=0
    _
  %s12 = ssub.s32 1, %s10
  %s13 = scalar_select 0, %s12, %s10
  $region1: #{tpu_custom_call.1} parent=0
    #allocation2 [shape = 'u8[4096]{0}', space=vmem, size = 0x1000, scoped, tag = 'input window, operand 1, single buffered']
    #allocation3 [shape = 's32[1]{0}', space=sflag, size = 0x4, scoped, tag = 'scoped memory for tpu_custom_call.1']
    #allocation4 [shape = 's32[1]{0}', space=sflag, size = 0x4, scoped, tag = 'scoped memory for tpu_custom_call.1']
    #allocation5 [shape = 'u8[8192]{0}', space=vmem, size = 0x2000, scoped, tag = 'input window, operand 5, single buffered']
    #allocation6 [shape = 's32[1]{0}', space=sflag, size = 0x4, scoped, tag = 'scoped memory for tpu_custom_call.1']
    #allocation7 [shape = 'u8[32768]{0}', space=vmem, size = 0x8000, scoped, tag = 'output window, operand 0, single buffered']
    %14 = vsyncpa [#allocation3], 0
    %15 = vsyncpa [#allocation6], 0
    %16 = vsyncpa [#allocation4], 0
    // Predicated region
    $region2: #{tpu_custom_call.1} parent=1 // pred_check
      _
    $region3: #{tpu_custom_call.1} parent=1 // pred_check_branch
      %18 = sbr.rel (0) target = $region5
    $region4: #{tpu_custom_call.1} parent=1 // pred_region
      _
    $region5: #{tpu_custom_call.1} parent=1 // pred_fallthru
      _
    // Predicated region
    $region6: #{tpu_custom_call.1} parent=1 // pred_check
      _
    $region7: #{tpu_custom_call.1} parent=1 // pred_check_branch
      %20 = sbr.rel (0) target = $region9
    $region8: #{tpu_custom_call.1} parent=1 // pred_region
      %22 = vsyncadd [#allocation3], 0
      %s23 = sshll.u32 %s1, 4
      %s24 = int_to_ptr.hbm [resolvable:$true] %s23
      %s25 = sshll.u32 [#allocation2], 4
      %s26 = int_to_ptr.vmem [resolvable:$true] %s25
      %31 = dma.hbm_to_vmem [thread:$0]  %s24, 128, %s26, [#allocation3], 64, 64, 4
    $region9: #{tpu_custom_call.1} parent=1 // pred_fallthru
      _
    // Predicated region
    $region10: #{tpu_custom_call.1} parent=1 // pred_check
      _
    $region11: #{tpu_custom_call.1} parent=1 // pred_check_branch
      %33 = sbr.rel (0) target = $region13
    $region12: #{tpu_custom_call.1} parent=1 // pred_region
      _
    $region13: #{tpu_custom_call.1} parent=1 // pred_fallthru
      _
    // Predicated region
    $region14: #{tpu_custom_call.1} parent=1 // pred_check
      _
    $region15: #{tpu_custom_call.1} parent=1 // pred_check_branch
      %35 = sbr.rel (0) target = $region17
    $region16: #{tpu_custom_call.1} parent=1 // pred_region
      _
    $region17: #{tpu_custom_call.1} parent=1 // pred_fallthru
      _
    // Predicated region
    $region18: #{tpu_custom_call.1} parent=1 // pred_check
      _
    $region19: #{tpu_custom_call.1} parent=1 // pred_check_branch
      %37 = sbr.rel (0) target = $region21
    $region20: #{tpu_custom_call.1} parent=1 // pred_region
      _
    $region21: #{tpu_custom_call.1} parent=1 // pred_fallthru
      _
    // Predicated region
    $region22: #{tpu_custom_call.1} parent=1 // pred_check
      _
    $region23: #{tpu_custom_call.1} parent=1 // pred_check_branch
      %39 = sbr.rel (0) target = $region25
    $region24: #{tpu_custom_call.1} parent=1 // pred_region
      %41 = vsyncadd [#allocation6], 0
      %s42 = sshll.u32 %s5, 4
      %s43 = int_to_ptr.hbm [resolvable:$true] %s42
      %s44 = sshll.u32 [#allocation5], 4
      %s45 = int_to_ptr.vmem [resolvable:$true] %s44
      %50 = dma.hbm_to_vmem [thread:$0]  %s43, 256, %s45, [#allocation6], 64, 64, 4
    $region25: #{tpu_custom_call.1} parent=1 // pred_fallthru
      _
    // Predicated region
    $region26: #{tpu_custom_call.1} parent=1 // pred_check
      _
    $region27: #{tpu_custom_call.1} parent=1 // pred_check_branch
      %52 = sbr.rel (0) target = $region29
    $region28: #{tpu_custom_call.1} parent=1 // pred_region
      _
    $region29: #{tpu_custom_call.1} parent=1 // pred_fallthru
      _
    // Predicated region
    $region30: #{tpu_custom_call.1} parent=1 // pred_check
      _
    $region31: #{tpu_custom_call.1} parent=1 // pred_check_branch
      %54 = sbr.rel (0) target = $region33
    $region32: #{tpu_custom_call.1} parent=1 // pred_region
      _
    $region33: #{tpu_custom_call.1} parent=1 // pred_fallthru
      _
    // Predicated region
    $region34: #{tpu_custom_call.1} parent=1 // pred_check
      _
    $region35: #{tpu_custom_call.1} parent=1 // pred_check_branch
      %56 = sbr.rel (0) target = $region37
    $region36: #{tpu_custom_call.1} parent=1 // pred_region
      _
    $region37: #{tpu_custom_call.1} parent=1 // pred_fallthru
      _
    // Predicated region
    $region38: #{tpu_custom_call.1} parent=1 // pred_check
      _
    $region39: #{tpu_custom_call.1} parent=1 // pred_check_branch
      %58 = sbr.rel (0) target = $region41
    $region40: #{tpu_custom_call.1} parent=1 // pred_region
      %60 = dma.done [#allocation3], 128
    $region41: #{tpu_custom_call.1} parent=1 // pred_fallthru
      _
    // Predicated region
    $region42: #{tpu_custom_call.1} parent=1 // pred_check
      _
    $region43: #{tpu_custom_call.1} parent=1 // pred_check_branch
      %62 = sbr.rel (0) target = $region45
    $region44: #{tpu_custom_call.1} parent=1 // pred_region
      %64 = dma.done [#allocation6], 256
    $region45: #{tpu_custom_call.1} parent=1 // pred_fallthru
      _
    %v66 = vld [vmem:[%s0] sm:$0xff]
    %v67 = vld [vmem:[%s0 + $0x8] sm:$0xff]
    %v68 = vld [vmem:[%s0 + $0x10] sm:$0xff]
    %v69 = vld [vmem:[%s0 + $0x18] sm:$0xff]
    %v70 = vpack.c.bf16 %v67, %v66
    %v71 = vpack.c.bf16 %v69, %v68
    %v72 = vld [vmem:[#allocation2] sm:$0xf]
    %v73 = vld [vmem:[#allocation2 + $0x4] sm:$0xf]
    %v74 = vld [vmem:[%s2] sm:$0x1]
    %v76 = vperm.slane %v74, 0
    %v80 = vunpack.c.l.b16 %v72
    %v81 = vunpack.c.l.b16 %v73
    %v82 = vpack.c.b16 %v81, %v80
    %vm84 = vcmask 130048
    %v86 = vsel %vm84, %v70, 0
    %v89 = vsel %vm84, %v71, 0
    %91 = vmatpush.bf16.msra.mxu0 0
    %92 = vmatpush.bf16.msra.mxu0 0
    %93 = vmatpush.bf16.msra.mxu0 0
    %94 = vmatpush.bf16.msra.mxu0 0
    %95 = vmatpush.bf16.msra.mxu0 0
    %96 = vmatpush.bf16.msra.mxu0 0
    %97 = vmatpush.bf16.msra.mxu0 0
    %98 = vmatpush.bf16.msra.mxu0 %v82
    %99 = vmatmul.bf16.gmra.mxu0 %v86
    %v100 = vpop.f32.mrf.mxu0
    %v101 = vadd.f32 %v76, %v100
    %v102 = vpop.f32.mrf.mxu0
    %v103 = vadd.f32 %v76, %v102
    %104 = vmatmul.bf16.gmra.mxu0 %v89
    %v105 = vpop.f32.mrf.mxu0
    %v106 = vadd.f32 %v76, %v105
    %v107 = vpop.f32.mrf.mxu0
    %v108 = vadd.f32 %v76, %v107
    %109 = vdwg.mxu0
    %v110 = vmax.f32 %v101, 0.0
    %v111 = vmax.f32 %v103, 0.0
    %v112 = vmax.f32 %v106, 0.0
    %v113 = vmax.f32 %v108, 0.0
    %v114 = vpack.c.bf16 %v111, %v110
    %v115 = vpack.c.bf16 %v113, %v112
    %v116 = vld [vmem:[%s3] sm:$0xf]
    %v117 = vld [vmem:[%s3 + $0x4] sm:$0xf]
    %v118 = vld [vmem:[%s3 + $0x8] sm:$0xf]
    %v119 = vld [vmem:[%s3 + $0xc] sm:$0xf]
    %v120 = vld [vmem:[%s4] sm:$0x1]
    %v122 = vperm.slane %v120, 0
    %v128 = vunpack.c.l.b16 %v116
    %v129 = vunpack.c.l.b16 %v117
    %v130 = vunpack.c.l.b16 %v118
    %v131 = vunpack.c.l.b16 %v119
    %v132 = vpack.c.b16 %v129, %v128
    %v133 = vpack.c.b16 %v131, %v130
    %vm136 = vcmask 261120
    %v138 = vsel %vm136, %v114, 0
    %v141 = vsel %vm136, %v115, 0
    %143 = vmatpush.bf16.msra.mxu0 0
    %144 = vmatpush.bf16.msra.mxu0 0
    %145 = vmatpush.bf16.msra.mxu0 0
    %146 = vmatpush.bf16.msra.mxu0 0
    %147 = vmatpush.bf16.msra.mxu0 0
    %148 = vmatpush.bf16.msra.mxu0 0
    %149 = vmatpush.bf16.msra.mxu0 %v133
    %150 = vmatpush.bf16.msra.mxu0 %v132
    %151 = vmatmul.bf16.gmra.mxu0 %v138
    %v152 = vpop.f32.mrf.mxu0
    %v153 = vadd.f32 %v122, %v152
    %v154 = vpop.f32.mrf.mxu0
    %v155 = vadd.f32 %v122, %v154
    %156 = vmatmul.bf16.gmra.mxu0 %v141
    %v157 = vpop.f32.mrf.mxu0
    %v158 = vadd.f32 %v122, %v157
    %v159 = vpop.f32.mrf.mxu0
    %v160 = vadd.f32 %v122, %v159
    %161 = vdwg.mxu0
    %v162 = vadd.f32 %v153, %v110
    %v163 = vadd.f32 %v155, %v111
    %v164 = vadd.f32 %v158, %v112
    %v165 = vadd.f32 %v160, %v113
    %v166 = vmax.f32 %v162, 0.0
    %v167 = vmax.f32 %v163, 0.0
    %v168 = vmax.f32 %v164, 0.0
    %v169 = vmax.f32 %v165, 0.0
    %v170 = vpack.c.bf16 %v167, %v166
    %v171 = vpack.c.bf16 %v169, %v168
    %v172 = vld [vmem:[#allocation5] sm:$0xf]
    %v173 = vld [vmem:[#allocation5 + $0x4] sm:$0xf]
    %v174 = vld [vmem:[#allocation5 + $0x8] sm:$0xf]
    %v175 = vld [vmem:[#allocation5 + $0xc] sm:$0xf]
    %v176 = vld [vmem:[%s6] sm:$0x1]
    %v178 = vperm.slane %v176, 0
    %v184 = vunpack.c.l.b16 %v172
    %v185 = vunpack.c.l.b16 %v173
    %v186 = vunpack.c.l.b16 %v174
    %v187 = vunpack.c.l.b16 %v175
    %v188 = vpack.c.b16 %v185, %v184
    %v189 = vpack.c.b16 %v187, %v186
    %v193 = vsel %vm136, %v170, 0
    %v196 = vsel %vm136, %v171, 0
    %198 = vmatpush.bf16.msra.mxu0 0
    %199 = vmatpush.bf16.msra.mxu0 0
    %200 = vmatpush.bf16.msra.mxu0 0
    %201 = vmatpush.bf16.msra.mxu0 0
    %202 = vmatpush.bf16.msra.mxu0 0
    %203 = vmatpush.bf16.msra.mxu0 0
    %204 = vmatpush.bf16.msra.mxu0 %v189
    %205 = vmatpush.bf16.msra.mxu0 %v188
    %206 = vmatmul.bf16.gmra.mxu0 %v193
    %v207 = vpop.f32.mrf.mxu0
    %v208 = vadd.f32 %v178, %v207
    %v209 = vpop.f32.mrf.mxu0
    %v210 = vadd.f32 %v178, %v209
    %211 = vmatmul.bf16.gmra.mxu0 %v196
    %v212 = vpop.f32.mrf.mxu0
    %v213 = vadd.f32 %v178, %v212
    %v214 = vpop.f32.mrf.mxu0
    %v215 = vadd.f32 %v178, %v214
    %216 = vdwg.mxu0
    %v217 = vadd.f32 %v208, %v166
    %v218 = vadd.f32 %v210, %v167
    %v219 = vadd.f32 %v213, %v168
    %v220 = vadd.f32 %v215, %v169
    %v221 = vmax.f32 %v217, 0.0
    %v222 = vmax.f32 %v218, 0.0
    %v223 = vmax.f32 %v219, 0.0
    %v224 = vmax.f32 %v220, 0.0
    %v225 = vpack.c.bf16 %v222, %v221
    %v226 = vpack.c.bf16 %v224, %v223
    %v227 = vld [vmem:[%s7] sm:$0xff]
    %v228 = vld [vmem:[%s7 + $0x8] sm:$0xff]
    %v229 = vld [vmem:[%s7 + $0x10] sm:$0xff]
    %v230 = vld [vmem:[%s7 + $0x18] sm:$0xff]
    %v231 = vld [vmem:[%s8] sm:$0x3]
    %v233 = vperm.slane %v231, 0
    %v234 = vperm.slane %v231, 1
    %v241 = vunpack.c.l.b16 %v227
    %v242 = vunpack.c.h.b16 %v227
    %v243 = vunpack.c.l.b16 %v228
    %v244 = vunpack.c.h.b16 %v228
    %v245 = vunpack.c.l.b16 %v229
    %v246 = vunpack.c.h.b16 %v229
    %v247 = vunpack.c.l.b16 %v230
    %v248 = vunpack.c.h.b16 %v230
    %v249 = vpack.c.b16 %v243, %v241
    %v250 = vpack.c.b16 %v244, %v242
    %v251 = vpack.c.b16 %v247, %v245
    %v252 = vpack.c.b16 %v248, %v246
    %v258 = vsel %vm136, %v225, 0
    %v261 = vsel %vm136, %v226, 0
    %263 = vmatpush.bf16.msra.mxu0 0
    %264 = vmatpush.bf16.msra.mxu0 0
    %265 = vmatpush.bf16.msra.mxu0 0
    %266 = vmatpush.bf16.msra.mxu0 0
    %267 = vmatpush.bf16.msra.mxu0 0
    %268 = vmatpush.bf16.msra.mxu0 0
    %269 = vmatpush.bf16.msra.mxu0 %v251
    %270 = vmatpush.bf16.msra.mxu0 %v249
    %271 = vmatmul.bf16.gmra.mxu0 %v258
    %v272 = vpop.f32.mrf.mxu0
    %v273 = vadd.f32 %v233, %v272
    %v274 = vpop.f32.mrf.mxu0
    %v275 = vadd.f32 %v233, %v274
    %276 = vmatmul.bf16.gmra.mxu0 %v261
    %v277 = vpop.f32.mrf.mxu0
    %v278 = vadd.f32 %v233, %v277
    %v279 = vpop.f32.mrf.mxu0
    %v280 = vadd.f32 %v233, %v279
    %281 = vdwg.mxu0
    %282 = vmatpush.bf16.msra.mxu0 0
    %283 = vmatpush.bf16.msra.mxu0 0
    %284 = vmatpush.bf16.msra.mxu0 0
    %285 = vmatpush.bf16.msra.mxu0 0
    %286 = vmatpush.bf16.msra.mxu0 0
    %287 = vmatpush.bf16.msra.mxu0 0
    %288 = vmatpush.bf16.msra.mxu0 %v252
    %289 = vmatpush.bf16.msra.mxu0 %v250
    %290 = vmatmul.bf16.gmra.mxu0 %v258
    %v291 = vpop.f32.mrf.mxu0
    %v292 = vadd.f32 %v234, %v291
    %v293 = vpop.f32.mrf.mxu0
    %v294 = vadd.f32 %v234, %v293
    %295 = vmatmul.bf16.gmra.mxu0 %v261
    %v296 = vpop.f32.mrf.mxu0
    %v297 = vadd.f32 %v234, %v296
    %v298 = vpop.f32.mrf.mxu0
    %v299 = vadd.f32 %v234, %v298
    %300 = vdwg.mxu0
    %301 = vst [vmem:[#allocation7] sm:$0xff] %v273
    %302 = vst [vmem:[#allocation7 + $0x8] sm:$0xff] %v292
    %303 = vst [vmem:[#allocation7 + $0x10] sm:$0xff] %v275
    %304 = vst [vmem:[#allocation7 + $0x18] sm:$0xff] %v294
    %305 = vst [vmem:[#allocation7 + $0x20] sm:$0xff] %v278
    %306 = vst [vmem:[#allocation7 + $0x28] sm:$0xff] %v297
    %307 = vst [vmem:[#allocation7 + $0x30] sm:$0xff] %v280
    %308 = vst [vmem:[#allocation7 + $0x38] sm:$0xff] %v299
    %vm309 = vcmask 39944
    %v310 = vsel %vm309, %v273, -inf
    %311 = vmax.xlane.f32.xlu0 %v310
    %v312 = vpop.xlane.xlu0 %311
    %v313 = vsel %vm309, %v275, -inf
    %314 = vmax.xlane.f32.xlu0 %v313
    %v315 = vpop.xlane.xlu0 %314
    %v316 = vsel %vm309, %v278, -inf
    %317 = vmax.xlane.f32.xlu0 %v316
    %v318 = vpop.xlane.xlu0 %317
    %v319 = vsel %vm309, %v280, -inf
    %320 = vmax.xlane.f32.xlu0 %v319
    %v321 = vpop.xlane.xlu0 %320
    %v322 = vsub.f32 %v273, %v312
    %v323 = vsub.f32 %v275, %v315
    %v324 = vsub.f32 %v278, %v318
    %v325 = vsub.f32 %v280, %v321
    %v326 = vmul.f32 %v322, 1.442695
    %v327 = vpow.pop %v326
    %v328 = vmul.f32 %v323, 1.442695
    %v329 = vpow.pop %v328
    %v330 = vmul.f32 %v324, 1.442695
    %v331 = vpow.pop %v330
    %v332 = vmul.f32 %v325, 1.442695
    %v333 = vpow.pop %v332
    %338 = vrot.lane.b32.xlu0 %v327, 127
    %v339 = vpop.permute.xlu0 %338
    %340 = vrot.lane.b32.xlu0 %v329, 127
    %v341 = vpop.permute.xlu0 %340
    %342 = vrot.lane.b32.xlu0 %v331, 127
    %v343 = vpop.permute.xlu0 %342
    %344 = vrot.lane.b32.xlu0 %v333, 127
    %v345 = vpop.permute.xlu0 %344
    %vm350 = vcmask 31744
    %v351 = vsel %vm350, %v339, 0.0
    %352 = vadd.xlane.f32.xlu0 %v351
    %v353 = vpop.xlane.xlu0 %352
    %v354 = vsel %vm350, %v341, 0.0
    %355 = vadd.xlane.f32.xlu0 %v354
    %v356 = vpop.xlane.xlu0 %355
    %v357 = vsel %vm350, %v343, 0.0
    %358 = vadd.xlane.f32.xlu0 %v357
    %v359 = vpop.xlane.xlu0 %358
    %v360 = vsel %vm350, %v345, 0.0
    %361 = vadd.xlane.f32.xlu0 %v360
    %v362 = vpop.xlane.xlu0 %361
    %v363 = vrcp.pop %v353
    %v364 = vrcp.pop %v356
    %v365 = vrcp.pop %v359
    %v366 = vrcp.pop %v362
    %v367 = vmul.f32 %v327, %v363
    %v368 = vmul.f32 %v329, %v364
    %v369 = vmul.f32 %v331, %v365
    %v370 = vmul.f32 %v333, %v366
    %371 = vst.msk [vmem:[#allocation7] sm:$0xff] %vm309, %v367
    %372 = vst.msk [vmem:[#allocation7 + $0x10] sm:$0xff] %vm309, %v368
    %373 = vst.msk [vmem:[#allocation7 + $0x20] sm:$0xff] %vm309, %v369
    %374 = vst.msk [vmem:[#allocation7 + $0x30] sm:$0xff] %vm309, %v370
    %vm375 = vcmask 72744
    %v376 = vsel %vm375, %v273, -inf
    %377 = vmax.xlane.f32.xlu0 %v376
    %v378 = vpop.xlane.xlu0 %377
    %v379 = vsel %vm375, %v275, -inf
    %380 = vmax.xlane.f32.xlu0 %v379
    %v381 = vpop.xlane.xlu0 %380
    %v382 = vsel %vm375, %v278, -inf
    %383 = vmax.xlane.f32.xlu0 %v382
    %v384 = vpop.xlane.xlu0 %383
    %v385 = vsel %vm375, %v280, -inf
    %386 = vmax.xlane.f32.xlu0 %v385
    %v387 = vpop.xlane.xlu0 %386
    %v388 = vsub.f32 %v273, %v378
    %v389 = vsub.f32 %v275, %v381
    %v390 = vsub.f32 %v278, %v384
    %v391 = vsub.f32 %v280, %v387
    %v392 = vmul.f32 %v388, 1.442695
    %v393 = vpow.pop %v392
    %v394 = vmul.f32 %v389, 1.442695
    %v395 = vpow.pop %v394
    %v396 = vmul.f32 %v390, 1.442695
    %v397 = vpow.pop %v396
    %v398 = vmul.f32 %v391, 1.442695
    %v399 = vpow.pop %v398
    %404 = vrot.lane.b32.xlu0 %v393, 123
    %v405 = vpop.permute.xlu0 %404
    %406 = vrot.lane.b32.xlu0 %v395, 123
    %v407 = vpop.permute.xlu0 %406
    %408 = vrot.lane.b32.xlu0 %v397, 123
    %v409 = vpop.permute.xlu0 %408
    %410 = vrot.lane.b32.xlu0 %v399, 123
    %v411 = vpop.permute.xlu0 %410
    %v416 = vsel %vm350, %v405, 0.0
    %417 = vadd.xlane.f32.xlu0 %v416
    %v418 = vpop.xlane.xlu0 %417
    %v419 = vsel %vm350, %v407, 0.0
    %420 = vadd.xlane.f32.xlu0 %v419
    %v421 = vpop.xlane.xlu0 %420
    %v422 = vsel %vm350, %v409, 0.0
    %423 = vadd.xlane.f32.xlu0 %v422
    %v424 = vpop.xlane.xlu0 %423
    %v425 = vsel %vm350, %v411, 0.0
    %426 = vadd.xlane.f32.xlu0 %v425
    %v427 = vpop.xlane.xlu0 %426
    %v428 = vrcp.pop %v418
    %v429 = vrcp.pop %v421
    %v430 = vrcp.pop %v424
    %v431 = vrcp.pop %v427
    %v432 = vmul.f32 %v393, %v428
    %v433 = vmul.f32 %v395, %v429
    %v434 = vmul.f32 %v397, %v430
    %v435 = vmul.f32 %v399, %v431
    %436 = vst.msk [vmem:[#allocation7] sm:$0xff] %vm375, %v432
    %437 = vst.msk [vmem:[#allocation7 + $0x10] sm:$0xff] %vm375, %v433
    %438 = vst.msk [vmem:[#allocation7 + $0x20] sm:$0xff] %vm375, %v434
    %439 = vst.msk [vmem:[#allocation7 + $0x30] sm:$0xff] %vm375, %v435
    %vm440 = vcmask 105544
    %v441 = vsel %vm440, %v273, -inf
    %442 = vmax.xlane.f32.xlu0 %v441
    %v443 = vpop.xlane.xlu0 %442
    %v444 = vsel %vm440, %v275, -inf
    %445 = vmax.xlane.f32.xlu0 %v444
    %v446 = vpop.xlane.xlu0 %445
    %v447 = vsel %vm440, %v278, -inf
    %448 = vmax.xlane.f32.xlu0 %v447
    %v449 = vpop.xlane.xlu0 %448
    %v450 = vsel %vm440, %v280, -inf
    %451 = vmax.xlane.f32.xlu0 %v450
    %v452 = vpop.xlane.xlu0 %451
    %v453 = vsub.f32 %v273, %v443
    %v454 = vsub.f32 %v275, %v446
    %v455 = vsub.f32 %v278, %v449
    %v456 = vsub.f32 %v280, %v452
    %v457 = vmul.f32 %v453, 1.442695
    %v458 = vpow.pop %v457
    %v459 = vmul.f32 %v454, 1.442695
    %v460 = vpow.pop %v459
    %v461 = vmul.f32 %v455, 1.442695
    %v462 = vpow.pop %v461
    %v463 = vmul.f32 %v456, 1.442695
    %v464 = vpow.pop %v463
    %469 = vrot.lane.b32.xlu0 %v458, 119
    %v470 = vpop.permute.xlu0 %469
    %471 = vrot.lane.b32.xlu0 %v460, 119
    %v472 = vpop.permute.xlu0 %471
    %473 = vrot.lane.b32.xlu0 %v462, 119
    %v474 = vpop.permute.xlu0 %473
    %475 = vrot.lane.b32.xlu0 %v464, 119
    %v476 = vpop.permute.xlu0 %475
    %v481 = vsel %vm350, %v470, 0.0
    %482 = vadd.xlane.f32.xlu0 %v481
    %v483 = vpop.xlane.xlu0 %482
    %v484 = vsel %vm350, %v472, 0.0
    %485 = vadd.xlane.f32.xlu0 %v484
    %v486 = vpop.xlane.xlu0 %485
    %v487 = vsel %vm350, %v474, 0.0
    %488 = vadd.xlane.f32.xlu0 %v487
    %v489 = vpop.xlane.xlu0 %488
    %v490 = vsel %vm350, %v476, 0.0
    %491 = vadd.xlane.f32.xlu0 %v490
    %v492 = vpop.xlane.xlu0 %491
    %v493 = vrcp.pop %v483
    %v494 = vrcp.pop %v486
    %v495 = vrcp.pop %v489
    %v496 = vrcp.pop %v492
    %v497 = vmul.f32 %v458, %v493
    %v498 = vmul.f32 %v460, %v494
    %v499 = vmul.f32 %v462, %v495
    %v500 = vmul.f32 %v464, %v496
    %501 = vst.msk [vmem:[#allocation7] sm:$0xff] %vm440, %v497
    %502 = vst.msk [vmem:[#allocation7 + $0x10] sm:$0xff] %vm440, %v498
    %503 = vst.msk [vmem:[#allocation7 + $0x20] sm:$0xff] %vm440, %v499
    %504 = vst.msk [vmem:[#allocation7 + $0x30] sm:$0xff] %vm440, %v500
    %vm505 = vcmask 138344
    %v506 = vsel %vm505, %v273, -inf
    %507 = vmax.xlane.f32.xlu0 %v506
    %v508 = vpop.xlane.xlu0 %507
    %v509 = vsel %vm505, %v275, -inf
    %510 = vmax.xlane.f32.xlu0 %v509
    %v511 = vpop.xlane.xlu0 %510
    %v512 = vsel %vm505, %v278, -inf
    %513 = vmax.xlane.f32.xlu0 %v512
    %v514 = vpop.xlane.xlu0 %513
    %v515 = vsel %vm505, %v280, -inf
    %516 = vmax.xlane.f32.xlu0 %v515
    %v517 = vpop.xlane.xlu0 %516
    %v518 = vsub.f32 %v273, %v508
    %v519 = vsub.f32 %v275, %v511
    %v520 = vsub.f32 %v278, %v514
    %v521 = vsub.f32 %v280, %v517
    %v522 = vmul.f32 %v518, 1.442695
    %v523 = vpow.pop %v522
    %v524 = vmul.f32 %v519, 1.442695
    %v525 = vpow.pop %v524
    %v526 = vmul.f32 %v520, 1.442695
    %v527 = vpow.pop %v526
    %v528 = vmul.f32 %v521, 1.442695
    %v529 = vpow.pop %v528
    %534 = vrot.lane.b32.xlu0 %v523, 115
    %v535 = vpop.permute.xlu0 %534
    %536 = vrot.lane.b32.xlu0 %v525, 115
    %v537 = vpop.permute.xlu0 %536
    %538 = vrot.lane.b32.xlu0 %v527, 115
    %v539 = vpop.permute.xlu0 %538
    %540 = vrot.lane.b32.xlu0 %v529, 115
    %v541 = vpop.permute.xlu0 %540
    %v546 = vsel %vm350, %v535, 0.0
    %547 = vadd.xlane.f32.xlu0 %v546
    %v548 = vpop.xlane.xlu0 %547
    %v549 = vsel %vm350, %v537, 0.0
    %550 = vadd.xlane.f32.xlu0 %v549
    %v551 = vpop.xlane.xlu0 %550
    %v552 = vsel %vm350, %v539, 0.0
    %553 = vadd.xlane.f32.xlu0 %v552
    %v554 = vpop.xlane.xlu0 %553
    %v555 = vsel %vm350, %v541, 0.0
    %556 = vadd.xlane.f32.xlu0 %v555
    %v557 = vpop.xlane.xlu0 %556
    %v558 = vrcp.pop %v548
    %v559 = vrcp.pop %v551
    %v560 = vrcp.pop %v554
    %v561 = vrcp.pop %v557
    %v562 = vmul.f32 %v523, %v558
    %v563 = vmul.f32 %v525, %v559
    %v564 = vmul.f32 %v527, %v560
    %v565 = vmul.f32 %v529, %v561
    %566 = vst.msk [vmem:[#allocation7] sm:$0xff] %vm505, %v562
    %567 = vst.msk [vmem:[#allocation7 + $0x10] sm:$0xff] %vm505, %v563
    %568 = vst.msk [vmem:[#allocation7 + $0x20] sm:$0xff] %vm505, %v564
    %569 = vst.msk [vmem:[#allocation7 + $0x30] sm:$0xff] %vm505, %v565
    %vm570 = vcmask 171144
    %v571 = vsel %vm570, %v273, -inf
    %572 = vmax.xlane.f32.xlu0 %v571
    %v573 = vpop.xlane.xlu0 %572
    %v574 = vsel %vm570, %v275, -inf
    %575 = vmax.xlane.f32.xlu0 %v574
    %v576 = vpop.xlane.xlu0 %575
    %v577 = vsel %vm570, %v278, -inf
    %578 = vmax.xlane.f32.xlu0 %v577
    %v579 = vpop.xlane.xlu0 %578
    %v580 = vsel %vm570, %v280, -inf
    %581 = vmax.xlane.f32.xlu0 %v580
    %v582 = vpop.xlane.xlu0 %581
    %v583 = vsub.f32 %v273, %v573
    %v584 = vsub.f32 %v275, %v576
    %v585 = vsub.f32 %v278, %v579
    %v586 = vsub.f32 %v280, %v582
    %v587 = vmul.f32 %v583, 1.442695
    %v588 = vpow.pop %v587
    %v589 = vmul.f32 %v584, 1.442695
    %v590 = vpow.pop %v589
    %v591 = vmul.f32 %v585, 1.442695
    %v592 = vpow.pop %v591
    %v593 = vmul.f32 %v586, 1.442695
    %v594 = vpow.pop %v593
    %599 = vrot.lane.b32.xlu0 %v588, 111
    %v600 = vpop.permute.xlu0 %599
    %601 = vrot.lane.b32.xlu0 %v590, 111
    %v602 = vpop.permute.xlu0 %601
    %603 = vrot.lane.b32.xlu0 %v592, 111
    %v604 = vpop.permute.xlu0 %603
    %605 = vrot.lane.b32.xlu0 %v594, 111
    %v606 = vpop.permute.xlu0 %605
    %v611 = vsel %vm350, %v600, 0.0
    %612 = vadd.xlane.f32.xlu0 %v611
    %v613 = vpop.xlane.xlu0 %612
    %v614 = vsel %vm350, %v602, 0.0
    %615 = vadd.xlane.f32.xlu0 %v614
    %v616 = vpop.xlane.xlu0 %615
    %v617 = vsel %vm350, %v604, 0.0
    %618 = vadd.xlane.f32.xlu0 %v617
    %v619 = vpop.xlane.xlu0 %618
    %v620 = vsel %vm350, %v606, 0.0
    %621 = vadd.xlane.f32.xlu0 %v620
    %v622 = vpop.xlane.xlu0 %621
    %v623 = vrcp.pop %v613
    %v624 = vrcp.pop %v616
    %v625 = vrcp.pop %v619
    %v626 = vrcp.pop %v622
    %v627 = vmul.f32 %v588, %v623
    %v628 = vmul.f32 %v590, %v624
    %v629 = vmul.f32 %v592, %v625
    %v630 = vmul.f32 %v594, %v626
    %631 = vst.msk [vmem:[#allocation7] sm:$0xff] %vm570, %v627
    %632 = vst.msk [vmem:[#allocation7 + $0x10] sm:$0xff] %vm570, %v628
    %633 = vst.msk [vmem:[#allocation7 + $0x20] sm:$0xff] %vm570, %v629
    %634 = vst.msk [vmem:[#allocation7 + $0x30] sm:$0xff] %vm570, %v630
    %vm635 = vcmask 203944
    %v636 = vsel %vm635, %v273, -inf
    %637 = vmax.xlane.f32.xlu0 %v636
    %v638 = vpop.xlane.xlu0 %637
    %v639 = vsel %vm635, %v275, -inf
    %640 = vmax.xlane.f32.xlu0 %v639
    %v641 = vpop.xlane.xlu0 %640
    %v642 = vsel %vm635, %v278, -inf
    %643 = vmax.xlane.f32.xlu0 %v642
    %v644 = vpop.xlane.xlu0 %643
    %v645 = vsel %vm635, %v280, -inf
    %646 = vmax.xlane.f32.xlu0 %v645
    %v647 = vpop.xlane.xlu0 %646
    %v648 = vsub.f32 %v273, %v638
    %v649 = vsub.f32 %v275, %v641
    %v650 = vsub.f32 %v278, %v644
    %v651 = vsub.f32 %v280, %v647
    %v652 = vmul.f32 %v648, 1.442695
    %v653 = vpow.pop %v652
    %v654 = vmul.f32 %v649, 1.442695
    %v655 = vpow.pop %v654
    %v656 = vmul.f32 %v650, 1.442695
    %v657 = vpow.pop %v656
    %v658 = vmul.f32 %v651, 1.442695
    %v659 = vpow.pop %v658
    %664 = vrot.lane.b32.xlu0 %v653, 107
    %v665 = vpop.permute.xlu0 %664
    %666 = vrot.lane.b32.xlu0 %v655, 107
    %v667 = vpop.permute.xlu0 %666
    %668 = vrot.lane.b32.xlu0 %v657, 107
    %v669 = vpop.permute.xlu0 %668
    %670 = vrot.lane.b32.xlu0 %v659, 107
    %v671 = vpop.permute.xlu0 %670
    %v676 = vsel %vm350, %v665, 0.0
    %677 = vadd.xlane.f32.xlu0 %v676
    %v678 = vpop.xlane.xlu0 %677
    %v679 = vsel %vm350, %v667, 0.0
    %680 = vadd.xlane.f32.xlu0 %v679
    %v681 = vpop.xlane.xlu0 %680
    %v682 = vsel %vm350, %v669, 0.0
    %683 = vadd.xlane.f32.xlu0 %v682
    %v684 = vpop.xlane.xlu0 %683
    %v685 = vsel %vm350, %v671, 0.0
    %686 = vadd.xlane.f32.xlu0 %v685
    %v687 = vpop.xlane.xlu0 %686
    %v688 = vrcp.pop %v678
    %v689 = vrcp.pop %v681
    %v690 = vrcp.pop %v684
    %v691 = vrcp.pop %v687
    %v692 = vmul.f32 %v653, %v688
    %v693 = vmul.f32 %v655, %v689
    %v694 = vmul.f32 %v657, %v690
    %v695 = vmul.f32 %v659, %v691
    %696 = vst.msk [vmem:[#allocation7] sm:$0xff] %vm635, %v692
    %697 = vst.msk [vmem:[#allocation7 + $0x10] sm:$0xff] %vm635, %v693
    %698 = vst.msk [vmem:[#allocation7 + $0x20] sm:$0xff] %vm635, %v694
    %699 = vst.msk [vmem:[#allocation7 + $0x30] sm:$0xff] %vm635, %v695
    %vm700 = vcmask 236744
    %v701 = vsel %vm700, %v273, -inf
    %702 = vmax.xlane.f32.xlu0 %v701
    %v703 = vpop.xlane.xlu0 %702
    %v704 = vsel %vm700, %v275, -inf
    %705 = vmax.xlane.f32.xlu0 %v704
    %v706 = vpop.xlane.xlu0 %705
    %v707 = vsel %vm700, %v278, -inf
    %708 = vmax.xlane.f32.xlu0 %v707
    %v709 = vpop.xlane.xlu0 %708
    %v710 = vsel %vm700, %v280, -inf
    %711 = vmax.xlane.f32.xlu0 %v710
    %v712 = vpop.xlane.xlu0 %711
    %v713 = vsub.f32 %v273, %v703
    %v714 = vsub.f32 %v275, %v706
    %v715 = vsub.f32 %v278, %v709
    %v716 = vsub.f32 %v280, %v712
    %v717 = vmul.f32 %v713, 1.442695
    %v718 = vpow.pop %v717
    %v719 = vmul.f32 %v714, 1.442695
    %v720 = vpow.pop %v719
    %v721 = vmul.f32 %v715, 1.442695
    %v722 = vpow.pop %v721
    %v723 = vmul.f32 %v716, 1.442695
    %v724 = vpow.pop %v723
    %729 = vrot.lane.b32.xlu0 %v718, 103
    %v730 = vpop.permute.xlu0 %729
    %731 = vrot.lane.b32.xlu0 %v720, 103
    %v732 = vpop.permute.xlu0 %731
    %733 = vrot.lane.b32.xlu0 %v722, 103
    %v734 = vpop.permute.xlu0 %733
    %735 = vrot.lane.b32.xlu0 %v724, 103
    %v736 = vpop.permute.xlu0 %735
    %v741 = vsel %vm350, %v730, 0.0
    %742 = vadd.xlane.f32.xlu0 %v741
    %v743 = vpop.xlane.xlu0 %742
    %v744 = vsel %vm350, %v732, 0.0
    %745 = vadd.xlane.f32.xlu0 %v744
    %v746 = vpop.xlane.xlu0 %745
    %v747 = vsel %vm350, %v734, 0.0
    %748 = vadd.xlane.f32.xlu0 %v747
    %v749 = vpop.xlane.xlu0 %748
    %v750 = vsel %vm350, %v736, 0.0
    %751 = vadd.xlane.f32.xlu0 %v750
    %v752 = vpop.xlane.xlu0 %751
    %v753 = vrcp.pop %v743
    %v754 = vrcp.pop %v746
    %v755 = vrcp.pop %v749
    %v756 = vrcp.pop %v752
    %v757 = vmul.f32 %v718, %v753
    %v758 = vmul.f32 %v720, %v754
    %v759 = vmul.f32 %v722, %v755
    %v760 = vmul.f32 %v724, %v756
    %761 = vst.msk [vmem:[#allocation7] sm:$0xff] %vm700, %v757
    %762 = vst.msk [vmem:[#allocation7 + $0x10] sm:$0xff] %vm700, %v758
    %763 = vst.msk [vmem:[#allocation7 + $0x20] sm:$0xff] %vm700, %v759
    %764 = vst.msk [vmem:[#allocation7 + $0x30] sm:$0xff] %vm700, %v760
    %vm765 = vcmask 269544
    %v766 = vsel %vm765, %v273, -inf
    %767 = vmax.xlane.f32.xlu0 %v766
    %v768 = vpop.xlane.xlu0 %767
    %v769 = vsel %vm765, %v275, -inf
    %770 = vmax.xlane.f32.xlu0 %v769
    %v771 = vpop.xlane.xlu0 %770
    %v772 = vsel %vm765, %v278, -inf
    %773 = vmax.xlane.f32.xlu0 %v772
    %v774 = vpop.xlane.xlu0 %773
    %v775 = vsel %vm765, %v280, -inf
    %776 = vmax.xlane.f32.xlu0 %v775
    %v777 = vpop.xlane.xlu0 %776
    %v778 = vsub.f32 %v273, %v768
    %v779 = vsub.f32 %v275, %v771
    %v780 = vsub.f32 %v278, %v774
    %v781 = vsub.f32 %v280, %v777
    %v782 = vmul.f32 %v778, 1.442695
    %v783 = vpow.pop %v782
    %v784 = vmul.f32 %v779, 1.442695
    %v785 = vpow.pop %v784
    %v786 = vmul.f32 %v780, 1.442695
    %v787 = vpow.pop %v786
    %v788 = vmul.f32 %v781, 1.442695
    %v789 = vpow.pop %v788
    %794 = vrot.lane.b32.xlu0 %v783, 99
    %v795 = vpop.permute.xlu0 %794
    %796 = vrot.lane.b32.xlu0 %v785, 99
    %v797 = vpop.permute.xlu0 %796
    %798 = vrot.lane.b32.xlu0 %v787, 99
    %v799 = vpop.permute.xlu0 %798
    %800 = vrot.lane.b32.xlu0 %v789, 99
    %v801 = vpop.permute.xlu0 %800
    %v806 = vsel %vm350, %v795, 0.0
    %807 = vadd.xlane.f32.xlu0 %v806
    %v808 = vpop.xlane.xlu0 %807
    %v809 = vsel %vm350, %v797, 0.0
    %810 = vadd.xlane.f32.xlu0 %v809
    %v811 = vpop.xlane.xlu0 %810
    %v812 = vsel %vm350, %v799, 0.0
    %813 = vadd.xlane.f32.xlu0 %v812
    %v814 = vpop.xlane.xlu0 %813
    %v815 = vsel %vm350, %v801, 0.0
    %816 = vadd.xlane.f32.xlu0 %v815
    %v817 = vpop.xlane.xlu0 %816
    %v818 = vrcp.pop %v808
    %v819 = vrcp.pop %v811
    %v820 = vrcp.pop %v814
    %v821 = vrcp.pop %v817
    %v822 = vmul.f32 %v783, %v818
    %v823 = vmul.f32 %v785, %v819
    %v824 = vmul.f32 %v787, %v820
    %v825 = vmul.f32 %v789, %v821
    %826 = vst.msk [vmem:[#allocation7] sm:$0xff] %vm765, %v822
    %827 = vst.msk [vmem:[#allocation7 + $0x10] sm:$0xff] %vm765, %v823
    %828 = vst.msk [vmem:[#allocation7 + $0x20] sm:$0xff] %vm765, %v824
    %829 = vst.msk [vmem:[#allocation7 + $0x30] sm:$0xff] %vm765, %v825
    %vm830 = vcmask 400648
    %v831 = vsel %vm830, %v273, -inf
    %832 = vmax.xlane.f32.xlu0 %v831
    %v833 = vpop.xlane.xlu0 %832
    %v834 = vsel %vm830, %v275, -inf
    %835 = vmax.xlane.f32.xlu0 %v834
    %v836 = vpop.xlane.xlu0 %835
    %v837 = vsel %vm830, %v278, -inf
    %838 = vmax.xlane.f32.xlu0 %v837
    %v839 = vpop.xlane.xlu0 %838
    %v840 = vsel %vm830, %v280, -inf
    %841 = vmax.xlane.f32.xlu0 %v840
    %v842 = vpop.xlane.xlu0 %841
    %v843 = vsub.f32 %v273, %v833
    %v844 = vsub.f32 %v275, %v836
    %v845 = vsub.f32 %v278, %v839
    %v846 = vsub.f32 %v280, %v842
    %v847 = vmul.f32 %v843, 1.442695
    %v848 = vpow.pop %v847
    %v849 = vmul.f32 %v844, 1.442695
    %v850 = vpow.pop %v849
    %v851 = vmul.f32 %v845, 1.442695
    %v852 = vpow.pop %v851
    %v853 = vmul.f32 %v846, 1.442695
    %v854 = vpow.pop %v853
    %859 = vrot.lane.b32.xlu0 %v848, 95
    %v860 = vpop.permute.xlu0 %859
    %861 = vrot.lane.b32.xlu0 %v850, 95
    %v862 = vpop.permute.xlu0 %861
    %863 = vrot.lane.b32.xlu0 %v852, 95
    %v864 = vpop.permute.xlu0 %863
    %865 = vrot.lane.b32.xlu0 %v854, 95
    %v866 = vpop.permute.xlu0 %865
    %v871 = vsel %vm84, %v860, 0.0
    %872 = vadd.xlane.f32.xlu0 %v871
    %v873 = vpop.xlane.xlu0 %872
    %v874 = vsel %vm84, %v862, 0.0
    %875 = vadd.xlane.f32.xlu0 %v874
    %v876 = vpop.xlane.xlu0 %875
    %v877 = vsel %vm84, %v864, 0.0
    %878 = vadd.xlane.f32.xlu0 %v877
    %v879 = vpop.xlane.xlu0 %878
    %v880 = vsel %vm84, %v866, 0.0
    %881 = vadd.xlane.f32.xlu0 %v880
    %v882 = vpop.xlane.xlu0 %881
    %v883 = vrcp.pop %v873
    %v884 = vrcp.pop %v876
    %v885 = vrcp.pop %v879
    %v886 = vrcp.pop %v882
    %v887 = vmul.f32 %v848, %v883
    %v888 = vmul.f32 %v850, %v884
    %v889 = vmul.f32 %v852, %v885
    %v890 = vmul.f32 %v854, %v886
    %891 = vst.msk [vmem:[#allocation7] sm:$0xff] %vm830, %v887
    %892 = vst.msk [vmem:[#allocation7 + $0x10] sm:$0xff] %vm830, %v888
    %893 = vst.msk [vmem:[#allocation7 + $0x20] sm:$0xff] %vm830, %v889
    %894 = vst.msk [vmem:[#allocation7 + $0x30] sm:$0xff] %vm830, %v890
    %vm895 = vcmask 531848
    %v896 = vsel %vm895, %v273, -inf
    %897 = vmax.xlane.f32.xlu0 %v896
    %v898 = vpop.xlane.xlu0 %897
    %v899 = vsel %vm895, %v275, -inf
    %900 = vmax.xlane.f32.xlu0 %v899
    %v901 = vpop.xlane.xlu0 %900
    %v902 = vsel %vm895, %v278, -inf
    %903 = vmax.xlane.f32.xlu0 %v902
    %v904 = vpop.xlane.xlu0 %903
    %v905 = vsel %vm895, %v280, -inf
    %906 = vmax.xlane.f32.xlu0 %v905
    %v907 = vpop.xlane.xlu0 %906
    %v908 = vsub.f32 %v273, %v898
    %v909 = vsub.f32 %v275, %v901
    %v910 = vsub.f32 %v278, %v904
    %v911 = vsub.f32 %v280, %v907
    %v912 = vmul.f32 %v908, 1.442695
    %v913 = vpow.pop %v912
    %v914 = vmul.f32 %v909, 1.442695
    %v915 = vpow.pop %v914
    %v916 = vmul.f32 %v910, 1.442695
    %v917 = vpow.pop %v916
    %v918 = vmul.f32 %v911, 1.442695
    %v919 = vpow.pop %v918
    %924 = vrot.lane.b32.xlu0 %v913, 79
    %v925 = vpop.permute.xlu0 %924
    %926 = vrot.lane.b32.xlu0 %v915, 79
    %v927 = vpop.permute.xlu0 %926
    %928 = vrot.lane.b32.xlu0 %v917, 79
    %v929 = vpop.permute.xlu0 %928
    %930 = vrot.lane.b32.xlu0 %v919, 79
    %v931 = vpop.permute.xlu0 %930
    %v936 = vsel %vm84, %v925, 0.0
    %937 = vadd.xlane.f32.xlu0 %v936
    %v938 = vpop.xlane.xlu0 %937
    %v939 = vsel %vm84, %v927, 0.0
    %940 = vadd.xlane.f32.xlu0 %v939
    %v941 = vpop.xlane.xlu0 %940
    %v942 = vsel %vm84, %v929, 0.0
    %943 = vadd.xlane.f32.xlu0 %v942
    %v944 = vpop.xlane.xlu0 %943
    %v945 = vsel %vm84, %v931, 0.0
    %946 = vadd.xlane.f32.xlu0 %v945
    %v947 = vpop.xlane.xlu0 %946
    %v948 = vrcp.pop %v938
    %v949 = vrcp.pop %v941
    %v950 = vrcp.pop %v944
    %v951 = vrcp.pop %v947
    %v952 = vmul.f32 %v913, %v948
    %v953 = vmul.f32 %v915, %v949
    %v954 = vmul.f32 %v917, %v950
    %v955 = vmul.f32 %v919, %v951
    %956 = vst.msk [vmem:[#allocation7] sm:$0xff] %vm895, %v952
    %957 = vst.msk [vmem:[#allocation7 + $0x10] sm:$0xff] %vm895, %v953
    %958 = vst.msk [vmem:[#allocation7 + $0x20] sm:$0xff] %vm895, %v954
    %959 = vst.msk [vmem:[#allocation7 + $0x30] sm:$0xff] %vm895, %v955
    %vm960 = vcmask 663048
    %v961 = vsel %vm960, %v273, -inf
    %962 = vmax.xlane.f32.xlu0 %v961
    %v963 = vpop.xlane.xlu0 %962
    %v964 = vsel %vm960, %v275, -inf
    %965 = vmax.xlane.f32.xlu0 %v964
    %v966 = vpop.xlane.xlu0 %965
    %v967 = vsel %vm960, %v278, -inf
    %968 = vmax.xlane.f32.xlu0 %v967
    %v969 = vpop.xlane.xlu0 %968
    %v970 = vsel %vm960, %v280, -inf
    %971 = vmax.xlane.f32.xlu0 %v970
    %v972 = vpop.xlane.xlu0 %971
    %v973 = vsub.f32 %v273, %v963
    %v974 = vsub.f32 %v275, %v966
    %v975 = vsub.f32 %v278, %v969
    %v976 = vsub.f32 %v280, %v972
    %v977 = vmul.f32 %v973, 1.442695
    %v978 = vpow.pop %v977
    %v979 = vmul.f32 %v974, 1.442695
    %v980 = vpow.pop %v979
    %v981 = vmul.f32 %v975, 1.442695
    %v982 = vpow.pop %v981
    %v983 = vmul.f32 %v976, 1.442695
    %v984 = vpow.pop %v983
    %989 = vrot.lane.b32.xlu0 %v978, 63
    %v990 = vpop.permute.xlu0 %989
    %991 = vrot.lane.b32.xlu0 %v980, 63
    %v992 = vpop.permute.xlu0 %991
    %993 = vrot.lane.b32.xlu0 %v982, 63
    %v994 = vpop.permute.xlu0 %993
    %995 = vrot.lane.b32.xlu0 %v984, 63
    %v996 = vpop.permute.xlu0 %995
    %v1001 = vsel %vm84, %v990, 0.0
    %1002 = vadd.xlane.f32.xlu0 %v1001
    %v1003 = vpop.xlane.xlu0 %1002
    %v1004 = vsel %vm84, %v992, 0.0
    %1005 = vadd.xlane.f32.xlu0 %v1004
    %v1006 = vpop.xlane.xlu0 %1005
    %v1007 = vsel %vm84, %v994, 0.0
    %1008 = vadd.xlane.f32.xlu0 %v1007
    %v1009 = vpop.xlane.xlu0 %1008
    %v1010 = vsel %vm84, %v996, 0.0
    %1011 = vadd.xlane.f32.xlu0 %v1010
    %v1012 = vpop.xlane.xlu0 %1011
    %v1013 = vrcp.pop %v1003
    %v1014 = vrcp.pop %v1006
    %v1015 = vrcp.pop %v1009
    %v1016 = vrcp.pop %v1012
    %v1017 = vmul.f32 %v978, %v1013
    %v1018 = vmul.f32 %v980, %v1014
    %v1019 = vmul.f32 %v982, %v1015
    %v1020 = vmul.f32 %v984, %v1016
    %1021 = vst.msk [vmem:[#allocation7] sm:$0xff] %vm960, %v1017
    %1022 = vst.msk [vmem:[#allocation7 + $0x10] sm:$0xff] %vm960, %v1018
    %1023 = vst.msk [vmem:[#allocation7 + $0x20] sm:$0xff] %vm960, %v1019
    %1024 = vst.msk [vmem:[#allocation7 + $0x30] sm:$0xff] %vm960, %v1020
    %vm1025 = vcmask 794248
    %v1026 = vsel %vm1025, %v273, -inf
    %1027 = vmax.xlane.f32.xlu0 %v1026
    %v1028 = vpop.xlane.xlu0 %1027
    %v1029 = vsel %vm1025, %v275, -inf
    %1030 = vmax.xlane.f32.xlu0 %v1029
    %v1031 = vpop.xlane.xlu0 %1030
    %v1032 = vsel %vm1025, %v278, -inf
    %1033 = vmax.xlane.f32.xlu0 %v1032
    %v1034 = vpop.xlane.xlu0 %1033
    %v1035 = vsel %vm1025, %v280, -inf
    %1036 = vmax.xlane.f32.xlu0 %v1035
    %v1037 = vpop.xlane.xlu0 %1036
    %v1038 = vsub.f32 %v273, %v1028
    %v1039 = vsub.f32 %v275, %v1031
    %v1040 = vsub.f32 %v278, %v1034
    %v1041 = vsub.f32 %v280, %v1037
    %v1042 = vmul.f32 %v1038, 1.442695
    %v1043 = vpow.pop %v1042
    %v1044 = vmul.f32 %v1039, 1.442695
    %v1045 = vpow.pop %v1044
    %v1046 = vmul.f32 %v1040, 1.442695
    %v1047 = vpow.pop %v1046
    %v1048 = vmul.f32 %v1041, 1.442695
    %v1049 = vpow.pop %v1048
    %1054 = vrot.lane.b32.xlu0 %v1043, 47
    %v1055 = vpop.permute.xlu0 %1054
    %1056 = vrot.lane.b32.xlu0 %v1045, 47
    %v1057 = vpop.permute.xlu0 %1056
    %1058 = vrot.lane.b32.xlu0 %v1047, 47
    %v1059 = vpop.permute.xlu0 %1058
    %1060 = vrot.lane.b32.xlu0 %v1049, 47
    %v1061 = vpop.permute.xlu0 %1060
    %v1066 = vsel %vm84, %v1055, 0.0
    %1067 = vadd.xlane.f32.xlu0 %v1066
    %v1068 = vpop.xlane.xlu0 %1067
    %v1069 = vsel %vm84, %v1057, 0.0
    %1070 = vadd.xlane.f32.xlu0 %v1069
    %v1071 = vpop.xlane.xlu0 %1070
    %v1072 = vsel %vm84, %v1059, 0.0
    %1073 = vadd.xlane.f32.xlu0 %v1072
    %v1074 = vpop.xlane.xlu0 %1073
    %v1075 = vsel %vm84, %v1061, 0.0
    %1076 = vadd.xlane.f32.xlu0 %v1075
    %v1077 = vpop.xlane.xlu0 %1076
    %v1078 = vrcp.pop %v1068
    %v1079 = vrcp.pop %v1071
    %v1080 = vrcp.pop %v1074
    %v1081 = vrcp.pop %v1077
    %v1082 = vmul.f32 %v1043, %v1078
    %v1083 = vmul.f32 %v1045, %v1079
    %v1084 = vmul.f32 %v1047, %v1080
    %v1085 = vmul.f32 %v1049, %v1081
    %1086 = vst.msk [vmem:[#allocation7] sm:$0xff] %vm1025, %v1082
    %1087 = vst.msk [vmem:[#allocation7 + $0x10] sm:$0xff] %vm1025, %v1083
    %1088 = vst.msk [vmem:[#allocation7 + $0x20] sm:$0xff] %vm1025, %v1084
    %1089 = vst.msk [vmem:[#allocation7 + $0x30] sm:$0xff] %vm1025, %v1085
    %vm1090 = vcmask 925448
    %v1091 = vsel %vm1090, %v273, -inf
    %1092 = vmax.xlane.f32.xlu0 %v1091
    %v1093 = vpop.xlane.xlu0 %1092
    %v1094 = vsel %vm1090, %v275, -inf
    %1095 = vmax.xlane.f32.xlu0 %v1094
    %v1096 = vpop.xlane.xlu0 %1095
    %v1097 = vsel %vm1090, %v278, -inf
    %1098 = vmax.xlane.f32.xlu0 %v1097
    %v1099 = vpop.xlane.xlu0 %1098
    %v1100 = vsel %vm1090, %v280, -inf
    %1101 = vmax.xlane.f32.xlu0 %v1100
    %v1102 = vpop.xlane.xlu0 %1101
    %v1103 = vsub.f32 %v273, %v1093
    %v1104 = vsub.f32 %v275, %v1096
    %v1105 = vsub.f32 %v278, %v1099
    %v1106 = vsub.f32 %v280, %v1102
    %v1107 = vmul.f32 %v1103, 1.442695
    %v1108 = vpow.pop %v1107
    %v1109 = vmul.f32 %v1104, 1.442695
    %v1110 = vpow.pop %v1109
    %v1111 = vmul.f32 %v1105, 1.442695
    %v1112 = vpow.pop %v1111
    %v1113 = vmul.f32 %v1106, 1.442695
    %v1114 = vpow.pop %v1113
    %1119 = vrot.lane.b32.xlu0 %v1108, 31
    %v1120 = vpop.permute.xlu0 %1119
    %1121 = vrot.lane.b32.xlu0 %v1110, 31
    %v1122 = vpop.permute.xlu0 %1121
    %1123 = vrot.lane.b32.xlu0 %v1112, 31
    %v1124 = vpop.permute.xlu0 %1123
    %1125 = vrot.lane.b32.xlu0 %v1114, 31
    %v1126 = vpop.permute.xlu0 %1125
    %v1131 = vsel %vm84, %v1120, 0.0
    %1132 = vadd.xlane.f32.xlu0 %v1131
    %v1133 = vpop.xlane.xlu0 %1132
    %v1134 = vsel %vm84, %v1122, 0.0
    %1135 = vadd.xlane.f32.xlu0 %v1134
    %v1136 = vpop.xlane.xlu0 %1135
    %v1137 = vsel %vm84, %v1124, 0.0
    %1138 = vadd.xlane.f32.xlu0 %v1137
    %v1139 = vpop.xlane.xlu0 %1138
    %v1140 = vsel %vm84, %v1126, 0.0
    %1141 = vadd.xlane.f32.xlu0 %v1140
    %v1142 = vpop.xlane.xlu0 %1141
    %v1143 = vrcp.pop %v1133
    %v1144 = vrcp.pop %v1136
    %v1145 = vrcp.pop %v1139
    %v1146 = vrcp.pop %v1142
    %v1147 = vmul.f32 %v1108, %v1143
    %v1148 = vmul.f32 %v1110, %v1144
    %v1149 = vmul.f32 %v1112, %v1145
    %v1150 = vmul.f32 %v1114, %v1146
    %1151 = vst.msk [vmem:[#allocation7] sm:$0xff] %vm1090, %v1147
    %1152 = vst.msk [vmem:[#allocation7 + $0x10] sm:$0xff] %vm1090, %v1148
    %1153 = vst.msk [vmem:[#allocation7 + $0x20] sm:$0xff] %vm1090, %v1149
    %1154 = vst.msk [vmem:[#allocation7 + $0x30] sm:$0xff] %vm1090, %v1150
    %vm1155 = vcmask 1048456
    %v1156 = vsel %vm1155, %v273, -inf
    %vm1157 = vcmask 7168
    %v1158 = vsel %vm1157, %v292, -inf
    %v1159 = vmax.f32 %v1156, %v1158
    %1160 = vmax.xlane.f32.xlu0 %v1159
    %v1161 = vpop.xlane.xlu0 %1160
    %v1162 = vsel %vm1155, %v275, -inf
    %v1163 = vsel %vm1157, %v294, -inf
    %v1164 = vmax.f32 %v1162, %v1163
    %1165 = vmax.xlane.f32.xlu0 %v1164
    %v1166 = vpop.xlane.xlu0 %1165
    %v1167 = vsel %vm1155, %v278, -inf
    %v1168 = vsel %vm1157, %v297, -inf
    %v1169 = vmax.f32 %v1167, %v1168
    %1170 = vmax.xlane.f32.xlu0 %v1169
    %v1171 = vpop.xlane.xlu0 %1170
    %v1172 = vsel %vm1155, %v280, -inf
    %v1173 = vsel %vm1157, %v299, -inf
    %v1174 = vmax.f32 %v1172, %v1173
    %1175 = vmax.xlane.f32.xlu0 %v1174
    %v1176 = vpop.xlane.xlu0 %1175
    %v1177 = vsub.f32 %v273, %v1161
    %v1178 = vsub.f32 %v292, %v1161
    %v1179 = vsub.f32 %v275, %v1166
    %v1180 = vsub.f32 %v294, %v1166
    %v1181 = vsub.f32 %v278, %v1171
    %v1182 = vsub.f32 %v297, %v1171
    %v1183 = vsub.f32 %v280, %v1176
    %v1184 = vsub.f32 %v299, %v1176
    %v1185 = vmul.f32 %v1177, 1.442695
    %v1186 = vpow.pop %v1185
    %v1187 = vmul.f32 %v1178, 1.442695
    %v1188 = vpow.pop %v1187
    %v1189 = vmul.f32 %v1179, 1.442695
    %v1190 = vpow.pop %v1189
    %v1191 = vmul.f32 %v1180, 1.442695
    %v1192 = vpow.pop %v1191
    %v1193 = vmul.f32 %v1181, 1.442695
    %v1194 = vpow.pop %v1193
    %v1195 = vmul.f32 %v1182, 1.442695
    %v1196 = vpow.pop %v1195
    %v1197 = vmul.f32 %v1183, 1.442695
    %v1198 = vpow.pop %v1197
    %v1199 = vmul.f32 %v1184, 1.442695
    %v1200 = vpow.pop %v1199
    %1209 = vrot.lane.b32.xlu0 %v1186, 15
    %v1210 = vpop.permute.xlu0 %1209
    %1211 = vrot.lane.b32.xlu0 %v1188, 15
    %v1212 = vpop.permute.xlu0 %1211
    %1213 = vrot.lane.b32.xlu0 %v1190, 15
    %v1214 = vpop.permute.xlu0 %1213
    %1215 = vrot.lane.b32.xlu0 %v1192, 15
    %v1216 = vpop.permute.xlu0 %1215
    %1217 = vrot.lane.b32.xlu0 %v1194, 15
    %v1218 = vpop.permute.xlu0 %1217
    %1219 = vrot.lane.b32.xlu0 %v1196, 15
    %v1220 = vpop.permute.xlu0 %1219
    %1221 = vrot.lane.b32.xlu0 %v1198, 15
    %v1222 = vpop.permute.xlu0 %1221
    %1223 = vrot.lane.b32.xlu0 %v1200, 15
    %v1224 = vpop.permute.xlu0 %1223
    %vm1225 = vcmask 121856
    %v1226 = vsel %vm1225, %v1210, %v1212
    %v1227 = vsel %vm1225, %v1214, %v1216
    %v1228 = vsel %vm1225, %v1218, %v1220
    %v1229 = vsel %vm1225, %v1222, %v1224
    %v1234 = vsel %vm84, %v1226, 0.0
    %1235 = vadd.xlane.f32.xlu0 %v1234
    %v1236 = vpop.xlane.xlu0 %1235
    %v1237 = vsel %vm84, %v1227, 0.0
    %1238 = vadd.xlane.f32.xlu0 %v1237
    %v1239 = vpop.xlane.xlu0 %1238
    %v1240 = vsel %vm84, %v1228, 0.0
    %1241 = vadd.xlane.f32.xlu0 %v1240
    %v1242 = vpop.xlane.xlu0 %1241
    %v1243 = vsel %vm84, %v1229, 0.0
    %1244 = vadd.xlane.f32.xlu0 %v1243
    %v1245 = vpop.xlane.xlu0 %1244
    %v1246 = vrcp.pop %v1236
    %v1247 = vrcp.pop %v1239
    %v1248 = vrcp.pop %v1242
    %v1249 = vrcp.pop %v1245
    %v1250 = vmul.f32 %v1186, %v1246
    %v1251 = vmul.f32 %v1188, %v1246
    %v1252 = vmul.f32 %v1190, %v1247
    %v1253 = vmul.f32 %v1192, %v1247
    %v1254 = vmul.f32 %v1194, %v1248
    %v1255 = vmul.f32 %v1196, %v1248
    %v1256 = vmul.f32 %v1198, %v1249
    %v1257 = vmul.f32 %v1200, %v1249
    %1258 = vst.msk [vmem:[#allocation7] sm:$0xff] %vm1155, %v1250
    %1259 = vst.msk [vmem:[#allocation7 + $0x8] sm:$0xff] %vm1157, %v1251
    %1260 = vst.msk [vmem:[#allocation7 + $0x10] sm:$0xff] %vm1155, %v1252
    %1261 = vst.msk [vmem:[#allocation7 + $0x18] sm:$0xff] %vm1157, %v1253
    %1262 = vst.msk [vmem:[#allocation7 + $0x20] sm:$0xff] %vm1155, %v1254
    %1263 = vst.msk [vmem:[#allocation7 + $0x28] sm:$0xff] %vm1157, %v1255
    %1264 = vst.msk [vmem:[#allocation7 + $0x30] sm:$0xff] %vm1155, %v1256
    %1265 = vst.msk [vmem:[#allocation7 + $0x38] sm:$0xff] %vm1157, %v1257
    %vm1266 = vcmask 138248
    %v1267 = vsel %vm1266, %v292, -inf
    %1268 = vmax.xlane.f32.xlu0 %v1267
    %v1269 = vpop.xlane.xlu0 %1268
    %v1270 = vsel %vm1266, %v294, -inf
    %1271 = vmax.xlane.f32.xlu0 %v1270
    %v1272 = vpop.xlane.xlu0 %1271
    %v1273 = vsel %vm1266, %v297, -inf
    %1274 = vmax.xlane.f32.xlu0 %v1273
    %v1275 = vpop.xlane.xlu0 %1274
    %v1276 = vsel %vm1266, %v299, -inf
    %1277 = vmax.xlane.f32.xlu0 %v1276
    %v1278 = vpop.xlane.xlu0 %1277
    %v1279 = vsub.f32 %v292, %v1269
    %v1280 = vsub.f32 %v294, %v1272
    %v1281 = vsub.f32 %v297, %v1275
    %v1282 = vsub.f32 %v299, %v1278
    %v1283 = vmul.f32 %v1279, 1.442695
    %v1284 = vpow.pop %v1283
    %v1285 = vmul.f32 %v1280, 1.442695
    %v1286 = vpow.pop %v1285
    %v1287 = vmul.f32 %v1281, 1.442695
    %v1288 = vpow.pop %v1287
    %v1289 = vmul.f32 %v1282, 1.442695
    %v1290 = vpow.pop %v1289
    %1295 = vrot.lane.b32.xlu0 %v1284, 127
    %v1296 = vpop.permute.xlu0 %1295
    %1297 = vrot.lane.b32.xlu0 %v1286, 127
    %v1298 = vpop.permute.xlu0 %1297
    %1299 = vrot.lane.b32.xlu0 %v1288, 127
    %v1300 = vpop.permute.xlu0 %1299
    %1301 = vrot.lane.b32.xlu0 %v1290, 127
    %v1302 = vpop.permute.xlu0 %1301
    %v1307 = vsel %vm84, %v1296, 0.0
    %1308 = vadd.xlane.f32.xlu0 %v1307
    %v1309 = vpop.xlane.xlu0 %1308
    %v1310 = vsel %vm84, %v1298, 0.0
    %1311 = vadd.xlane.f32.xlu0 %v1310
    %v1312 = vpop.xlane.xlu0 %1311
    %v1313 = vsel %vm84, %v1300, 0.0
    %1314 = vadd.xlane.f32.xlu0 %v1313
    %v1315 = vpop.xlane.xlu0 %1314
    %v1316 = vsel %vm84, %v1302, 0.0
    %1317 = vadd.xlane.f32.xlu0 %v1316
    %v1318 = vpop.xlane.xlu0 %1317
    %v1319 = vrcp.pop %v1309
    %v1320 = vrcp.pop %v1312
    %v1321 = vrcp.pop %v1315
    %v1322 = vrcp.pop %v1318
    %v1323 = vmul.f32 %v1284, %v1319
    %v1324 = vmul.f32 %v1286, %v1320
    %v1325 = vmul.f32 %v1288, %v1321
    %v1326 = vmul.f32 %v1290, %v1322
    %1327 = vst.msk [vmem:[#allocation7 + $0x8] sm:$0xff] %vm1266, %v1323
    %1328 = vst.msk [vmem:[#allocation7 + $0x18] sm:$0xff] %vm1266, %v1324
    %1329 = vst.msk [vmem:[#allocation7 + $0x28] sm:$0xff] %vm1266, %v1325
    %1330 = vst.msk [vmem:[#allocation7 + $0x38] sm:$0xff] %vm1266, %v1326
    %vm1331 = vcmask 269448
    %v1332 = vsel %vm1331, %v292, -inf
    %1333 = vmax.xlane.f32.xlu0 %v1332
    %v1334 = vpop.xlane.xlu0 %1333
    %v1335 = vsel %vm1331, %v294, -inf
    %1336 = vmax.xlane.f32.xlu0 %v1335
    %v1337 = vpop.xlane.xlu0 %1336
    %v1338 = vsel %vm1331, %v297, -inf
    %1339 = vmax.xlane.f32.xlu0 %v1338
    %v1340 = vpop.xlane.xlu0 %1339
    %v1341 = vsel %vm1331, %v299, -inf
    %1342 = vmax.xlane.f32.xlu0 %v1341
    %v1343 = vpop.xlane.xlu0 %1342
    %v1344 = vsub.f32 %v292, %v1334
    %v1345 = vsub.f32 %v294, %v1337
    %v1346 = vsub.f32 %v297, %v1340
    %v1347 = vsub.f32 %v299, %v1343
    %v1348 = vmul.f32 %v1344, 1.442695
    %v1349 = vpow.pop %v1348
    %v1350 = vmul.f32 %v1345, 1.442695
    %v1351 = vpow.pop %v1350
    %v1352 = vmul.f32 %v1346, 1.442695
    %v1353 = vpow.pop %v1352
    %v1354 = vmul.f32 %v1347, 1.442695
    %v1355 = vpow.pop %v1354
    %1360 = vrot.lane.b32.xlu0 %v1349, 111
    %v1361 = vpop.permute.xlu0 %1360
    %1362 = vrot.lane.b32.xlu0 %v1351, 111
    %v1363 = vpop.permute.xlu0 %1362
    %1364 = vrot.lane.b32.xlu0 %v1353, 111
    %v1365 = vpop.permute.xlu0 %1364
    %1366 = vrot.lane.b32.xlu0 %v1355, 111
    %v1367 = vpop.permute.xlu0 %1366
    %v1372 = vsel %vm84, %v1361, 0.0
    %1373 = vadd.xlane.f32.xlu0 %v1372
    %v1374 = vpop.xlane.xlu0 %1373
    %v1375 = vsel %vm84, %v1363, 0.0
    %1376 = vadd.xlane.f32.xlu0 %v1375
    %v1377 = vpop.xlane.xlu0 %1376
    %v1378 = vsel %vm84, %v1365, 0.0
    %1379 = vadd.xlane.f32.xlu0 %v1378
    %v1380 = vpop.xlane.xlu0 %1379
    %v1381 = vsel %vm84, %v1367, 0.0
    %1382 = vadd.xlane.f32.xlu0 %v1381
    %v1383 = vpop.xlane.xlu0 %1382
    %v1384 = vrcp.pop %v1374
    %v1385 = vrcp.pop %v1377
    %v1386 = vrcp.pop %v1380
    %v1387 = vrcp.pop %v1383
    %v1388 = vmul.f32 %v1349, %v1384
    %v1389 = vmul.f32 %v1351, %v1385
    %v1390 = vmul.f32 %v1353, %v1386
    %v1391 = vmul.f32 %v1355, %v1387
    %1392 = vst.msk [vmem:[#allocation7 + $0x8] sm:$0xff] %vm1331, %v1388
    %1393 = vst.msk [vmem:[#allocation7 + $0x18] sm:$0xff] %vm1331, %v1389
    %1394 = vst.msk [vmem:[#allocation7 + $0x28] sm:$0xff] %vm1331, %v1390
    %1395 = vst.msk [vmem:[#allocation7 + $0x38] sm:$0xff] %vm1331, %v1391
    // Predicated region
    $region46: #{tpu_custom_call.1} parent=1 // pred_check
      _
    $region47: #{tpu_custom_call.1} parent=1 // pred_check_branch
      %1397 = sbr.rel (0) target = $region49
    $region48: #{tpu_custom_call.1} parent=1 // pred_region
      %1399 = vsyncadd [#allocation4], 0
      %s1400 = sshll.u32 [#allocation7], 4
      %s1401 = int_to_ptr.vmem [resolvable:$true] %s1400
      %s1402 = sshll.u32 %s9, 4
      %s1403 = int_to_ptr.hbm [resolvable:$true] %s1402
      %1408 = dma.vmem_to_hbm [thread:$0]  %s1401, 1024, %s1403, [#allocation4], 256, 256, 16
    $region49: #{tpu_custom_call.1} parent=1 // pred_fallthru
      _
    // Predicated region
    $region50: #{tpu_custom_call.1} parent=1 // pred_check
      _
    $region51: #{tpu_custom_call.1} parent=1 // pred_check_branch
      %1410 = sbr.rel (0) target = $region53
    $region52: #{tpu_custom_call.1} parent=1 // pred_region
      %1412 = dma.done [#allocation4], 1024
    $region53: #{tpu_custom_call.1} parent=1 // pred_fallthru
      _
    %1413 = vsyncpa [#allocation3], 1
    %1414 = vsyncpa [#allocation6], 1
    %1415 = vsyncpa [#allocation4], 1

</llo_original>
